<compile_context>
chip_gen: v7x
topology: tpu7x:2x2x1
jax: 0.10.0
libtpu: 0.0.40
codegen_flags: <defaults>
</compile_context>

<pallas_src>
import jax
import jax.numpy as jnp
from jax.experimental import pallas as pl
from jax.experimental.pallas import tpu as pltpu

SUBLANE = 8        # f32 sublane tile
LANE = 128         # lane tile
LN_EPS = 1e-5
_INV_SQRT2 = 0.7071067811865476
MAX_TILE_B = 128   # batch tile ceiling (review: 64-256 depending on gen; 128 is
                   # a safe bf16 default across v5e/v6e/v7x)


def _round_up(x, m):
    return (x + m - 1) // m * m


def _pad_axis(a, axis, size):
    pad = size - a.shape[axis]
    if pad <= 0:
        return a
    widths = [(0, 0)] * a.ndim
    widths[axis] = (0, pad)
    return jnp.pad(a, widths)


def _nbytes(a):
    return a.size * a.dtype.itemsize


def _choose_batch_tiling(b, max_tile=MAX_TILE_B):
    bp = _round_up(b, SUBLANE)
    tile = min(max_tile, bp)
    bp = _round_up(bp, tile)
    return bp, tile


def _vmem_budget(act_bytes_per_step, weights):
    # double-buffered activations + resident weights + headroom, clamped for
    # the 64 MiB-physical v7x.
    raw = 2 * act_bytes_per_step + 2 * sum(_nbytes(w) for w in weights) + (4 << 20)
    return int(min(max(raw, 16 << 20), 48 << 20))


# ----------------------------------------------------------------------------
# In-kernel math
# ----------------------------------------------------------------------------

def _projection_head(x, w1, b1, w2, b2, gamma, beta):
    """ProjectionHead.forward on in-register values:
         projected = Linear(x); h = GELU(projected); y = Linear(h)
         y = dropout(y)   # identity (eval)
         y = y + projected; out = LayerNorm(y)
       Matmul operands bf16 (MXU-native), accumulation f32."""
    projected = jnp.dot(x.astype(jnp.bfloat16), w1,
                        preferred_element_type=jnp.float32) + b1
    # exact GELU (PyTorch nn.GELU default): 0.5*x*(1+erf(x/sqrt(2)))
    h = 0.5 * projected * (1.0 + jax.lax.erf(projected * jnp.float32(_INV_SQRT2)))
    y = jnp.dot(h.astype(jnp.bfloat16), w2,
                preferred_element_type=jnp.float32) + b2
    y = y + projected                                   # residual; dropout = id

    # LayerNorm over last dim, eps=1e-5, biased variance (two-pass, centered).
    mean = jnp.mean(y, axis=-1, keepdims=True)
    c = y - mean
    var = jnp.mean(c * c, axis=-1, keepdims=True)
    return c * jax.lax.rsqrt(var + LN_EPS) * gamma + beta


# ----------------------------------------------------------------------------
# Pallas kernels
# ----------------------------------------------------------------------------

def image_path_kernel(x_ref, wv_ref, bv_ref, w1_ref, b1_ref, w2_ref, b2_ref,
                      gamma_ref, beta_ref, o_ref):
    """Fused image path: global-avg-pool -> linear -> ProjectionHead.
    x_ref: [TILE_B, H*W, C] bf16 (channel-last).  Pool over the sublane (H*W)
    axis with f32 accumulation; 1/(H*W) is folded into wv at prep time."""
    # TODO(synk): real VisionEncoder is a frozen pretrained ResNet50 backbone;
    # replaced here by a deterministic avg-pool + linear stand-in.
    pooled = jnp.sum(x_ref[...].astype(jnp.float32), axis=1)        # [TILE_B, C]
    feats = jnp.dot(pooled.astype(jnp.bfloat16), wv_ref[...],
                    preferred_element_type=jnp.float32) + bv_ref[...]
    o_ref[...] = _projection_head(
        feats, w1_ref[...], b1_ref[...], w2_ref[...], b2_ref[...],
        gamma_ref[...], beta_ref[...]).astype(o_ref.dtype)


def text_path_kernel(cls_ids_ref, emb_hbm, w1_ref, b1_ref, w2_ref, b2_ref,
                     gamma_ref, beta_ref, o_ref, emb_buf, sem):
    """Fused text path: CLS-token embedding gather (per-row DMA from HBM,
    ids scalar-prefetched in SMEM) -> ProjectionHead."""
    # TODO(synk): real TextEncoder is a frozen pretrained DistilBERT; replaced
    # by a deterministic CLS-token embedding lookup ([:, 0, :] semantics kept).
    tile_b = emb_buf.shape[0]
    base = pl.program_id(0) * tile_b
    copies = []
    for r in range(tile_b):                 # static unroll: tile_b row DMAs
        cp = pltpu.make_async_copy(emb_hbm.at[cls_ids_ref[base + r]],
                                   emb_buf.at[r], sem.at[r])
        cp.start()
        copies.append(cp)
    for cp in copies:
        cp.wait()
    o_ref[...] = _projection_head(
        emb_buf[...], w1_ref[...], b1_ref[...], w2_ref[...], b2_ref[...],
        gamma_ref[...], beta_ref[...]).astype(o_ref.dtype)


# ----------------------------------------------------------------------------
# Wrappers
# ----------------------------------------------------------------------------

def image_path_pallas(images_nchw, vp, pp, *, max_tile_b=MAX_TILE_B):
    B, C, H, W = images_nchw.shape
    hw = H * W
    bp, tile_b = _choose_batch_tiling(B, max_tile_b)
    # Channel-last bf16 block: half the DMA bytes, lane-dense pooled result.
    x = jnp.transpose(images_nchw.reshape(B, C, hw), (0, 2, 1)).astype(jnp.bfloat16)
    x = _pad_axis(x, 0, bp)
    proj_dim = pp["w2"].shape[1]
    weights = (vp["w"], vp["b"], pp["w1"], pp["b1"], pp["w2"], pp["b2"],
               pp["gamma"], pp["beta"])

    def _resident(arr):
        return pl.BlockSpec(arr.shape, lambda i: (0, 0))

    act_bytes = tile_b * hw * C * 2 + tile_b * proj_dim * 4
    vmem_bytes = _vmem_budget(act_bytes, weights)
    flops = 2 * bp * (hw * C + C * vp["w"].shape[1]
                      + pp["w1"].shape[0] * proj_dim + proj_dim * proj_dim)
    bytes_accessed = (_nbytes(x) + sum(_nbytes(w) for w in weights)
                      + bp * proj_dim * 4)

    out = pl.pallas_call(
        image_path_kernel,
        out_shape=jax.ShapeDtypeStruct((bp, proj_dim), jnp.float32),
        grid_spec=pltpu.PrefetchScalarGridSpec(
            num_scalar_prefetch=0,
            grid=(bp // tile_b,),
            in_specs=[pl.BlockSpec((tile_b, hw, C), lambda i: (i, 0, 0))]
                     + [_resident(w) for w in weights],
            out_specs=pl.BlockSpec((tile_b, proj_dim), lambda i: (i, 0)),
        ),
        compiler_params=pltpu.CompilerParams(
            dimension_semantics=("parallel",),
            vmem_limit_bytes=vmem_bytes),
        cost_estimate=pl.CostEstimate(flops=int(flops),
                                      transcendentals=int(bp * proj_dim),
                                      bytes_accessed=int(bytes_accessed)),
    )(x, *weights)
    return out[:B]


def text_path_pallas(input_ids, attention_mask, emb_table, pp, *,
                     max_tile_b=MAX_TILE_B):
    del attention_mask
    B = input_ids.shape[0]
    bp, tile_b = _choose_batch_tiling(B, max_tile_b)
    cls_ids = _pad_axis(input_ids[:, 0].astype(jnp.int32), 0, bp)  # pad ids = 0 (valid row)
    e_pad = emb_table.shape[1]          # table columns already lane-padded at prep
    proj_dim = pp["w2"].shape[1]
    weights = (pp["w1"], pp["b1"], pp["w2"], pp["b2"], pp["gamma"], pp["beta"])

    def _resident(arr):
        return pl.BlockSpec(arr.shape, lambda i, ids: (0, 0))

    act_bytes = tile_b * e_pad * 4 + tile_b * proj_dim * 4
    vmem_bytes = _vmem_budget(act_bytes, weights)
    flops = 2 * bp * (pp["w1"].shape[0] * proj_dim + proj_dim * proj_dim)
    bytes_accessed = (bp * e_pad * 4 + sum(_nbytes(w) for w in weights)
                      + bp * proj_dim * 4)

    out = pl.pallas_call(
        text_path_kernel,
        out_shape=jax.ShapeDtypeStruct((bp, proj_dim), jnp.float32),
        grid_spec=pltpu.PrefetchScalarGridSpec(
            num_scalar_prefetch=1,
            grid=(bp // tile_b,),
            in_specs=[pl.BlockSpec(memory_space=pl.ANY)]     # emb table stays in HBM
                     + [_resident(w) for w in weights],
            out_specs=pl.BlockSpec((tile_b, proj_dim), lambda i, ids: (i, 0)),
            scratch_shapes=[pltpu.VMEM((tile_b, e_pad), jnp.float32),
                            pltpu.SemaphoreType.DMA((tile_b,))],
        ),
        compiler_params=pltpu.CompilerParams(
            dimension_semantics=("parallel",),
            vmem_limit_bytes=vmem_bytes),
        cost_estimate=pl.CostEstimate(flops=int(flops),
                                      transcendentals=int(bp * proj_dim),
                                      bytes_accessed=int(bytes_accessed)),
    )(cls_ids, emb_table, *weights)
    return out[:B]


def clip_forward(prepped, image_features=None, text_input_ids=None,
                 text_attention_mask=None):
    image_embedding = None
    if image_features is not None:
        image_embedding = image_path_pallas(
            image_features, prepped["vision"], prepped["image_projection"])
    text_embedding = None
    if text_input_ids is not None:
        text_embedding = text_path_pallas(
            text_input_ids, text_attention_mask,
            prepped["text_emb"], prepped["text_projection"])
    return image_embedding, text_embedding


# ----------------------------------------------------------------------------
# Parameter construction (deterministic) and kernel-side prep
# ----------------------------------------------------------------------------

def make_projection_head_params(key, embedding_dim, projection_dim):
    k1, k2 = jax.random.split(key)
    scale = 0.1
    return {
        # stored pre-transposed: [in, out] so kernel does x @ W
        "w1": scale * jax.random.normal(k1, (embedding_dim, projection_dim), jnp.float32),
        "b1": jnp.full((1, projection_dim), 0.01, jnp.float32),
        "w2": scale * jax.random.normal(k2, (projection_dim, projection_dim), jnp.float32),
        "b2": jnp.full((1, projection_dim), -0.01, jnp.float32),
        "gamma": jnp.ones((1, projection_dim), jnp.float32),
        "beta": jnp.zeros((1, projection_dim), jnp.float32),
    }


def make_clip_params(key, in_channels, image_embedding_dim,
                     text_embedding_dim, projection_dim, vocab_size):
    kv, kt, ki, kp = jax.random.split(key, 4)
    return {
        "vision": {
            "w": 0.5 * jax.random.normal(kv, (in_channels, image_embedding_dim), jnp.float32),
            "b": jnp.zeros((1, image_embedding_dim), jnp.float32),
        },
        "text_emb": 0.5 * jax.random.normal(kt, (vocab_size, text_embedding_dim), jnp.float32),
        "image_projection": make_projection_head_params(ki, image_embedding_dim, projection_dim),
        "text_projection": make_projection_head_params(kp, text_embedding_dim, projection_dim),
    }


def _prep_projection_head(p, k_pad):
    return {
        "w1": _pad_axis(p["w1"], 0, k_pad).astype(jnp.bfloat16),   # zero-pad K rows
        "b1": p["b1"],
        "w2": p["w2"].astype(jnp.bfloat16),
        "b2": p["b2"],
        "gamma": p["gamma"],
        "beta": p["beta"],
    }


def prep_clip_params(params, hw):
    img_e = params["image_projection"]["w1"].shape[0]
    txt_e = params["text_projection"]["w1"].shape[0]
    img_ep = _round_up(img_e, LANE)
    txt_ep = _round_up(txt_e, LANE)
    vision = {
        # fold 1/(H*W) pooling scale into the weight; zero-pad the output dim
        # to the padded image-embedding width; bf16 MXU operand.
        "w": _pad_axis(params["vision"]["w"] / jnp.float32(hw), 1, img_ep).astype(jnp.bfloat16),
        "b": _pad_axis(params["vision"]["b"], 1, img_ep),
    }
    return {
        "vision": vision,
        # one-time lane-pad of the embedding table (so the in-kernel gather is
        # lane-dense and no per-call activation padding is needed).
        "text_emb": _pad_axis(params["text_emb"], 1, txt_ep),
        "image_projection": _prep_projection_head(params["image_projection"], img_ep),
        "text_projection": _prep_projection_head(params["text_projection"], txt_ep),
    }


# ----------------------------------------------------------------------------
# Pure-JAX f32 reference (PyTorch eval semantics)
# ----------------------------------------------------------------------------

def projection_head_ref(x, p):
    projected = x @ p["w1"] + p["b1"]
    h = 0.5 * projected * (1.0 + jax.lax.erf(projected / jnp.sqrt(2.0)))
    y = h @ p["w2"] + p["b2"]
    y = y + projected
    mean = jnp.mean(y, axis=-1, keepdims=True)
    var = jnp.mean((y - mean) ** 2, axis=-1, keepdims=True)
    return (y - mean) / jnp.sqrt(var + LN_EPS) * p["gamma"] + p["beta"]


# ----------------------------------------------------------------------------
# Main
# ----------------------------------------------------------------------------

if __name__ == "__main__":
    key = jax.random.PRNGKey(0)
    k_par, k_img, k_ids = jax.random.split(key, 3)

    # Small shapes implied by the forward pass
    B, C, H, W = 4, 16, 16, 16          # image_features: NCHW
    SEQ = 8
    VOCAB = 1000
    IMAGE_EMB_DIM = 64
    TEXT_EMB_DIM = 32
    PROJ_DIM = 128

    params = make_clip_params(k_par, C, IMAGE_EMB_DIM, TEXT_EMB_DIM,
                              PROJ_DIM, VOCAB)
    prepped = prep_clip_params(params, H * W)

    image_features = jax.random.normal(k_img, (B, C, H, W), jnp.float32)
    text_input_ids = jax.random.randint(k_ids, (B, SEQ), 0, VOCAB, jnp.int32)
    text_attention_mask = jnp.ones((B, SEQ), jnp.int32)

    image_embedding, text_embedding = clip_forward(
        prepped,
        image_features=image_features,
        text_input_ids=text_input_ids,
        text_attention_mask=text_attention_mask,
    )
    jax.block_until_ready((image_embedding, text_embedding))

    assert image_embedding.shape == (B, PROJ_DIM)
    assert text_embedding.shape == (B, PROJ_DIM)

    # Sanity check vs a pure-f32 JAX reference.  The kernel uses bf16 MXU
    # operands and a bf16 image block (f32 accumulation everywhere), so
    # tolerance is loosened to 5e-2.
    img_feats_ref = (jnp.mean(image_features.reshape(B, C, H * W), axis=-1)
                     @ params["vision"]["w"] + params["vision"]["b"])
    img_ref = projection_head_ref(img_feats_ref, params["image_projection"])
    txt_feats_ref = jnp.take(params["text_emb"], text_input_ids[:, 0], axis=0)
    txt_ref = projection_head_ref(txt_feats_ref, params["text_projection"])
    assert jnp.allclose(image_embedding, img_ref, atol=5e-2, rtol=5e-2)
    assert jnp.allclose(text_embedding, txt_ref, atol=5e-2, rtol=5e-2)

    print("KERNEL_OK")
</pallas_src>

<mosaic_0001>
module attributes {stable_mosaic.version = 11 : i64} {
  func.func @image_path_kernel(%arg0: i32, %arg1: memref<8x256x16xbf16, #tpu.memory_space<vmem>>, %arg2: memref<16x128xbf16, #tpu.memory_space<vmem>>, %arg3: memref<1x128xf32, #tpu.memory_space<vmem>>, %arg4: memref<128x128xbf16, #tpu.memory_space<vmem>>, %arg5: memref<1x128xf32, #tpu.memory_space<vmem>>, %arg6: memref<128x128xbf16, #tpu.memory_space<vmem>>, %arg7: memref<1x128xf32, #tpu.memory_space<vmem>>, %arg8: memref<1x128xf32, #tpu.memory_space<vmem>>, %arg9: memref<1x128xf32, #tpu.memory_space<vmem>>, %arg10: memref<8x128xf32, #tpu.memory_space<vmem>>) attributes {dimension_semantics = [#tpu.dimension_semantics<parallel>], iteration_bounds = array<i64: 1>, scalar_prefetch = 0 : i64, scratch_operands = 0 : i64, tpu.core_type = #tpu.core_type<tc>, window_params = [{transform_indices = @transform_0, window_bounds = array<i64: 8, 256, 16>}, {pipeline_mode = #tpu.pipeline_mode<synchronous>, transform_indices = @transform_1, window_bounds = array<i64: 16, 128>}, {pipeline_mode = #tpu.pipeline_mode<synchronous>, transform_indices = @transform_2, window_bounds = array<i64: 1, 128>}, {pipeline_mode = #tpu.pipeline_mode<synchronous>, transform_indices = @transform_3, window_bounds = array<i64: 128, 128>}, {pipeline_mode = #tpu.pipeline_mode<synchronous>, transform_indices = @transform_4, window_bounds = array<i64: 1, 128>}, {pipeline_mode = #tpu.pipeline_mode<synchronous>, transform_indices = @transform_5, window_bounds = array<i64: 128, 128>}, {pipeline_mode = #tpu.pipeline_mode<synchronous>, transform_indices = @transform_6, window_bounds = array<i64: 1, 128>}, {pipeline_mode = #tpu.pipeline_mode<synchronous>, transform_indices = @transform_7, window_bounds = array<i64: 1, 128>}, {pipeline_mode = #tpu.pipeline_mode<synchronous>, transform_indices = @transform_8, window_bounds = array<i64: 1, 128>}, {transform_indices = @transform_9, window_bounds = array<i64: 8, 128>}]} {
    %c0 = arith.constant 0 : index
    %c0_0 = arith.constant 0 : index
    %c0_1 = arith.constant 0 : index
    %0 = vector.load %arg1[%c0, %c0_0, %c0_1] : memref<8x256x16xbf16, #tpu.memory_space<vmem>>, vector<8x256x16xbf16>
    %1 = arith.extf %0 : vector<8x256x16xbf16> to vector<8x256x16xf32>
    %cst = arith.constant dense<0.000000e+00> : vector<8x16xf32>
    %2 = vector.multi_reduction <add>, %1, %cst [1] : vector<8x256x16xf32> to vector<8x16xf32>
    %3 = arith.truncf %2 : vector<8x16xf32> to vector<8x16xbf16>
    %c0_2 = arith.constant 0 : index
    %c0_3 = arith.constant 0 : index
    %4 = vector.load %arg2[%c0_2, %c0_3] : memref<16x128xbf16, #tpu.memory_space<vmem>>, vector<16x128xbf16>
    %cst_4 = arith.constant dense<0.000000e+00> : vector<8x128xf32>
    %5 = tpu.matmul %3, %4, %cst_4 {dimension_numbers = #tpu.dot_dimension_numbers<[1], [0], [0], [1], [0, 0, 1, 1], [], []>} : vector<8x16xbf16>, vector<16x128xbf16>, vector<8x128xf32> -> vector<8x128xf32>
    %c0_5 = arith.constant 0 : index
    %c0_6 = arith.constant 0 : index
    %6 = vector.load %arg3[%c0_5, %c0_6] : memref<1x128xf32, #tpu.memory_space<vmem>>, vector<1x128xf32>
    %7 = vector.broadcast %6 : vector<1x128xf32> to vector<8x128xf32>
    %8 = arith.addf %5, %7 : vector<8x128xf32>
    %c0_7 = arith.constant 0 : index
    %c0_8 = arith.constant 0 : index
    %9 = vector.load %arg4[%c0_7, %c0_8] : memref<128x128xbf16, #tpu.memory_space<vmem>>, vector<128x128xbf16>
    %c0_9 = arith.constant 0 : index
    %c0_10 = arith.constant 0 : index
    %10 = vector.load %arg5[%c0_9, %c0_10] : memref<1x128xf32, #tpu.memory_space<vmem>>, vector<1x128xf32>
    %c0_11 = arith.constant 0 : index
    %c0_12 = arith.constant 0 : index
    %11 = vector.load %arg6[%c0_11, %c0_12] : memref<128x128xbf16, #tpu.memory_space<vmem>>, vector<128x128xbf16>
    %c0_13 = arith.constant 0 : index
    %c0_14 = arith.constant 0 : index
    %12 = vector.load %arg7[%c0_13, %c0_14] : memref<1x128xf32, #tpu.memory_space<vmem>>, vector<1x128xf32>
    %c0_15 = arith.constant 0 : index
    %c0_16 = arith.constant 0 : index
    %13 = vector.load %arg8[%c0_15, %c0_16] : memref<1x128xf32, #tpu.memory_space<vmem>>, vector<1x128xf32>
    %c0_17 = arith.constant 0 : index
    %c0_18 = arith.constant 0 : index
    %14 = vector.load %arg9[%c0_17, %c0_18] : memref<1x128xf32, #tpu.memory_space<vmem>>, vector<1x128xf32>
    %15 = arith.truncf %8 : vector<8x128xf32> to vector<8x128xbf16>
    %cst_19 = arith.constant dense<0.000000e+00> : vector<8x128xf32>
    %16 = tpu.matmul %15, %9, %cst_19 {dimension_numbers = #tpu.dot_dimension_numbers<[1], [0], [0], [1], [0, 0, 1, 1], [], []>} : vector<8x128xbf16>, vector<128x128xbf16>, vector<8x128xf32> -> vector<8x128xf32>
    %17 = vector.broadcast %10 : vector<1x128xf32> to vector<8x128xf32>
    %18 = arith.addf %16, %17 : vector<8x128xf32>
    %cst_20 = arith.constant 5.000000e-01 : f32
    %19 = vector.broadcast %cst_20 : f32 to vector<8x128xf32>
    %20 = arith.mulf %19, %18 : vector<8x128xf32>
    %cst_21 = arith.constant 0.707106769 : f32
    %21 = vector.broadcast %cst_21 : f32 to vector<8x128xf32>
    %22 = arith.mulf %18, %21 : vector<8x128xf32>
    %23 = math.erf %22 : vector<8x128xf32>
    %cst_22 = arith.constant 1.000000e+00 : f32
    %24 = vector.broadcast %cst_22 : f32 to vector<8x128xf32>
    %25 = arith.addf %24, %23 : vector<8x128xf32>
    %26 = arith.mulf %20, %25 : vector<8x128xf32>
    %27 = arith.truncf %26 : vector<8x128xf32> to vector<8x128xbf16>
    %cst_23 = arith.constant dense<0.000000e+00> : vector<8x128xf32>
    %28 = tpu.matmul %27, %11, %cst_23 {dimension_numbers = #tpu.dot_dimension_numbers<[1], [0], [0], [1], [0, 0, 1, 1], [], []>} : vector<8x128xbf16>, vector<128x128xbf16>, vector<8x128xf32> -> vector<8x128xf32>
    %29 = vector.broadcast %12 : vector<1x128xf32> to vector<8x128xf32>
    %30 = arith.addf %28, %29 : vector<8x128xf32>
    %31 = arith.addf %30, %18 : vector<8x128xf32>
    %cst_24 = arith.constant dense<0.000000e+00> : vector<8xf32>
    %32 = vector.multi_reduction <add>, %31, %cst_24 [1] : vector<8x128xf32> to vector<8xf32>
    %33 = vector.shape_cast %32 : vector<8xf32> to vector<8x1xf32>
    %cst_25 = arith.constant 1.280000e+02 : f32
    %34 = vector.broadcast %cst_25 : f32 to vector<8x1xf32>
    %35 = arith.divf %33, %34 : vector<8x1xf32>
    %36 = vector.broadcast %35 : vector<8x1xf32> to vector<8x128xf32>
    %37 = arith.subf %31, %36 : vector<8x128xf32>
    %38 = arith.mulf %37, %37 : vector<8x128xf32>
    %cst_26 = arith.constant dense<0.000000e+00> : vector<8xf32>
    %39 = vector.multi_reduction <add>, %38, %cst_26 [1] : vector<8x128xf32> to vector<8xf32>
    %40 = vector.shape_cast %39 : vector<8xf32> to vector<8x1xf32>
    %cst_27 = arith.constant 1.280000e+02 : f32
    %41 = vector.broadcast %cst_27 : f32 to vector<8x1xf32>
    %42 = arith.divf %40, %41 : vector<8x1xf32>
    %cst_28 = arith.constant 9.99999974E-6 : f32
    %43 = vector.broadcast %cst_28 : f32 to vector<8x1xf32>
    %44 = arith.addf %42, %43 : vector<8x1xf32>
    %45 = math.rsqrt %44 : vector<8x1xf32>
    %46 = vector.broadcast %45 : vector<8x1xf32> to vector<8x128xf32>
    %47 = arith.mulf %37, %46 : vector<8x128xf32>
    %48 = vector.broadcast %13 : vector<1x128xf32> to vector<8x128xf32>
    %49 = arith.mulf %47, %48 : vector<8x128xf32>
    %50 = vector.broadcast %14 : vector<1x128xf32> to vector<8x128xf32>
    %51 = arith.addf %49, %50 : vector<8x128xf32>
    %c0_29 = arith.constant 0 : index
    %c0_30 = arith.constant 0 : index
    %52 = vector.load %arg10[%c0_29, %c0_30] : memref<8x128xf32, #tpu.memory_space<vmem>>, vector<8x128xf32>
    tpu.vector_store %arg10[%c0_29, %c0_30], %51 {strides = array<i32>} : memref<8x128xf32, #tpu.memory_space<vmem>>, vector<8x128xf32>,
    return
  }
  func.func @transform_0(%arg0: i32) -> (i32, i32, i32) {
    %c0_i32 = arith.constant 0 : i32
    %c0_i32_0 = arith.constant 0 : i32
    %c0_i32_1 = arith.constant 0 : i32
    return %arg0, %c0_i32, %c0_i32_0 : i32, i32, i32
  }
  func.func @transform_1(%arg0: i32) -> (i32, i32) {
    %c0_i32 = arith.constant 0 : i32
    %c0_i32_0 = arith.constant 0 : i32
    %c0_i32_1 = arith.constant 0 : i32
    return %c0_i32, %c0_i32_0 : i32, i32
  }
  func.func @transform_2(%arg0: i32) -> (i32, i32) {
    %c0_i32 = arith.constant 0 : i32
    %c0_i32_0 = arith.constant 0 : i32
    %c0_i32_1 = arith.constant 0 : i32
    return %c0_i32, %c0_i32_0 : i32, i32
  }
  func.func @transform_3(%arg0: i32) -> (i32, i32) {
    %c0_i32 = arith.constant 0 : i32
    %c0_i32_0 = arith.constant 0 : i32
    %c0_i32_1 = arith.constant 0 : i32
    return %c0_i32, %c0_i32_0 : i32, i32
  }
  func.func @transform_4(%arg0: i32) -> (i32, i32) {
    %c0_i32 = arith.constant 0 : i32
    %c0_i32_0 = arith.constant 0 : i32
    %c0_i32_1 = arith.constant 0 : i32
    return %c0_i32, %c0_i32_0 : i32, i32
  }
  func.func @transform_5(%arg0: i32) -> (i32, i32) {
    %c0_i32 = arith.constant 0 : i32
    %c0_i32_0 = arith.constant 0 : i32
    %c0_i32_1 = arith.constant 0 : i32
    return %c0_i32, %c0_i32_0 : i32, i32
  }
  func.func @transform_6(%arg0: i32) -> (i32, i32) {
    %c0_i32 = arith.constant 0 : i32
    %c0_i32_0 = arith.constant 0 : i32
    %c0_i32_1 = arith.constant 0 : i32
    return %c0_i32, %c0_i32_0 : i32, i32
  }
  func.func @transform_7(%arg0: i32) -> (i32, i32) {
    %c0_i32 = arith.constant 0 : i32
    %c0_i32_0 = arith.constant 0 : i32
    %c0_i32_1 = arith.constant 0 : i32
    return %c0_i32, %c0_i32_0 : i32, i32
  }
  func.func @transform_8(%arg0: i32) -> (i32, i32) {
    %c0_i32 = arith.constant 0 : i32
    %c0_i32_0 = arith.constant 0 : i32
    %c0_i32_1 = arith.constant 0 : i32
    return %c0_i32, %c0_i32_0 : i32, i32
  }
  func.func @transform_9(%arg0: i32) -> (i32, i32) {
    %c0_i32 = arith.constant 0 : i32
    %c0_i32_0 = arith.constant 0 : i32
    return %arg0, %c0_i32 : i32, i32
  }
}

</mosaic_0001>

<llo_original>
// kernel: tpu_custom_call.1
$region0: #{tpu_custom_call.1}
  #allocation0 [shape = 'u32[]', space=smem, size = 0x4, offset = 0x4, fixed_abs, tag = 'smem constant byte address 0x4 - core index']
  #allocation1 [shape = 'u32[144,128]{1,0:T(1,128)}', space=vmem, size = 0x12000, scoped, tag = 'internal scratch']
  %s0 = inlined_call_operand.vmem [shape: bf16[8,256,16], index: 0, kind: input, shape index: {}]
  %s1 = inlined_call_operand.vmem [shape: bf16[16,128], index: 1, kind: input, shape index: {}]
  %s2 = inlined_call_operand.vmem [shape: f32[1,128], index: 2, kind: input, shape index: {}]
  %s3 = inlined_call_operand.vmem [shape: bf16[128,128], index: 3, kind: input, shape index: {}]
  %s4 = inlined_call_operand.vmem [shape: f32[1,128], index: 4, kind: input, shape index: {}]
  %s5 = inlined_call_operand.vmem [shape: bf16[128,128], index: 5, kind: input, shape index: {}]
  %s6 = inlined_call_operand.vmem [shape: f32[1,128], index: 6, kind: input, shape index: {}]
  %s7 = inlined_call_operand.vmem [shape: f32[1,128], index: 7, kind: input, shape index: {}]
  %s8 = inlined_call_operand.vmem [shape: f32[1,128], index: 8, kind: input, shape index: {}]
  %s9 = inlined_call_operand.hbm [shape: f32[8,128], index: 9, kind: output, shape index: {}]
  %s10 = sld [smem:[#allocation0]]
  $region46: #{tpu_custom_call.1} parent=0
    _
  %s12 = ssub.s32 1, %s10
  %s13 = scalar_select 0, %s12, %s10
  $region1: #{tpu_custom_call.1} parent=0
    #allocation2 [shape = 'u8[4096]{0}', space=vmem, size = 0x1000, scoped, tag = 'output window, operand 0, single buffered']
    #allocation3 [shape = 's32[1]{0}', space=sflag, size = 0x4, scoped, tag = 'scoped memory for tpu_custom_call.1']
    %14 = vsyncpa [#allocation3], 0
    // Predicated region
    $region2: #{tpu_custom_call.1} parent=1 // pred_check
      _
    $region3: #{tpu_custom_call.1} parent=1 // pred_check_branch
      %16 = sbr.rel (0) target = $region5
    $region4: #{tpu_custom_call.1} parent=1 // pred_region
      _
    $region5: #{tpu_custom_call.1} parent=1 // pred_fallthru
      _
    // Predicated region
    $region6: #{tpu_custom_call.1} parent=1 // pred_check
      _
    $region7: #{tpu_custom_call.1} parent=1 // pred_check_branch
      %18 = sbr.rel (0) target = $region9
    $region8: #{tpu_custom_call.1} parent=1 // pred_region
      _
    $region9: #{tpu_custom_call.1} parent=1 // pred_fallthru
      _
    // Predicated region
    $region10: #{tpu_custom_call.1} parent=1 // pred_check
      _
    $region11: #{tpu_custom_call.1} parent=1 // pred_check_branch
      %20 = sbr.rel (0) target = $region13
    $region12: #{tpu_custom_call.1} parent=1 // pred_region
      _
    $region13: #{tpu_custom_call.1} parent=1 // pred_fallthru
      _
    // Predicated region
    $region14: #{tpu_custom_call.1} parent=1 // pred_check
      _
    $region15: #{tpu_custom_call.1} parent=1 // pred_check_branch
      %22 = sbr.rel (0) target = $region17
    $region16: #{tpu_custom_call.1} parent=1 // pred_region
      _
    $region17: #{tpu_custom_call.1} parent=1 // pred_fallthru
      _
    // Predicated region
    $region18: #{tpu_custom_call.1} parent=1 // pred_check
      _
    $region19: #{tpu_custom_call.1} parent=1 // pred_check_branch
      %24 = sbr.rel (0) target = $region21
    $region20: #{tpu_custom_call.1} parent=1 // pred_region
      _
    $region21: #{tpu_custom_call.1} parent=1 // pred_fallthru
      _
    // Predicated region
    $region22: #{tpu_custom_call.1} parent=1 // pred_check
      _
    $region23: #{tpu_custom_call.1} parent=1 // pred_check_branch
      %26 = sbr.rel (0) target = $region25
    $region24: #{tpu_custom_call.1} parent=1 // pred_region
      _
    $region25: #{tpu_custom_call.1} parent=1 // pred_fallthru
      _
    // Predicated region
    $region26: #{tpu_custom_call.1} parent=1 // pred_check
      _
    $region27: #{tpu_custom_call.1} parent=1 // pred_check_branch
      %28 = sbr.rel (0) target = $region29
    $region28: #{tpu_custom_call.1} parent=1 // pred_region
      _
    $region29: #{tpu_custom_call.1} parent=1 // pred_fallthru
      _
    // Predicated region
    $region30: #{tpu_custom_call.1} parent=1 // pred_check
      _
    $region31: #{tpu_custom_call.1} parent=1 // pred_check_branch
      %30 = sbr.rel (0) target = $region33
    $region32: #{tpu_custom_call.1} parent=1 // pred_region
      _
    $region33: #{tpu_custom_call.1} parent=1 // pred_fallthru
      _
    // Predicated region
    $region34: #{tpu_custom_call.1} parent=1 // pred_check
      _
    $region35: #{tpu_custom_call.1} parent=1 // pred_check_branch
      %32 = sbr.rel (0) target = $region37
    $region36: #{tpu_custom_call.1} parent=1 // pred_region
      _
    $region37: #{tpu_custom_call.1} parent=1 // pred_fallthru
      _
    %v34 = vld [vmem:[%s0] sm:$0xf]
    %v35 = vld [vmem:[%s0 + $0x4] sm:$0xf]
    %v36 = vld [vmem:[%s0 + $0x8] sm:$0xf]
    %v37 = vld [vmem:[%s0 + $0xc] sm:$0xf]
    %v38 = vld [vmem:[%s0 + $0x10] sm:$0xf]
    %v39 = vld [vmem:[%s0 + $0x14] sm:$0xf]
    %v40 = vld [vmem:[%s0 + $0x18] sm:$0xf]
    %v41 = vld [vmem:[%s0 + $0x1c] sm:$0xf]
    %v42 = vld [vmem:[%s0 + $0x20] sm:$0xf]
    %v43 = vld [vmem:[%s0 + $0x24] sm:$0xf]
    %v44 = vld [vmem:[%s0 + $0x28] sm:$0xf]
    %v45 = vld [vmem:[%s0 + $0x2c] sm:$0xf]
    %v46 = vld [vmem:[%s0 + $0x30] sm:$0xf]
    %v47 = vld [vmem:[%s0 + $0x34] sm:$0xf]
    %v48 = vld [vmem:[%s0 + $0x38] sm:$0xf]
    %v49 = vld [vmem:[%s0 + $0x3c] sm:$0xf]
    %v50 = vld [vmem:[%s0 + $0x40] sm:$0xf]
    %v51 = vld [vmem:[%s0 + $0x44] sm:$0xf]
    %v52 = vld [vmem:[%s0 + $0x48] sm:$0xf]
    %v53 = vld [vmem:[%s0 + $0x4c] sm:$0xf]
    %v54 = vld [vmem:[%s0 + $0x50] sm:$0xf]
    %v55 = vld [vmem:[%s0 + $0x54] sm:$0xf]
    %v56 = vld [vmem:[%s0 + $0x58] sm:$0xf]
    %v57 = vld [vmem:[%s0 + $0x5c] sm:$0xf]
    %v58 = vld [vmem:[%s0 + $0x60] sm:$0xf]
    %v59 = vld [vmem:[%s0 + $0x64] sm:$0xf]
    %v60 = vld [vmem:[%s0 + $0x68] sm:$0xf]
    %v61 = vld [vmem:[%s0 + $0x6c] sm:$0xf]
    %v62 = vld [vmem:[%s0 + $0x70] sm:$0xf]
    %v63 = vld [vmem:[%s0 + $0x74] sm:$0xf]
    %v64 = vld [vmem:[%s0 + $0x78] sm:$0xf]
    %v65 = vld [vmem:[%s0 + $0x7c] sm:$0xf]
    %v66 = vld [vmem:[%s0 + $0x80] sm:$0xf]
    %v67 = vld [vmem:[%s0 + $0x84] sm:$0xf]
    %v68 = vld [vmem:[%s0 + $0x88] sm:$0xf]
    %v69 = vld [vmem:[%s0 + $0x8c] sm:$0xf]
    %v70 = vld [vmem:[%s0 + $0x90] sm:$0xf]
    %v71 = vld [vmem:[%s0 + $0x94] sm:$0xf]
    %v72 = vld [vmem:[%s0 + $0x98] sm:$0xf]
    %v73 = vld [vmem:[%s0 + $0x9c] sm:$0xf]
    %v74 = vld [vmem:[%s0 + $0xa0] sm:$0xf]
    %v75 = vld [vmem:[%s0 + $0xa4] sm:$0xf]
    %v76 = vld [vmem:[%s0 + $0xa8] sm:$0xf]
    %v77 = vld [vmem:[%s0 + $0xac] sm:$0xf]
    %v78 = vld [vmem:[%s0 + $0xb0] sm:$0xf]
    %v79 = vld [vmem:[%s0 + $0xb4] sm:$0xf]
    %v80 = vld [vmem:[%s0 + $0xb8] sm:$0xf]
    %v81 = vld [vmem:[%s0 + $0xbc] sm:$0xf]
    %v82 = vld [vmem:[%s0 + $0xc0] sm:$0xf]
    %v83 = vld [vmem:[%s0 + $0xc4] sm:$0xf]
    %v84 = vld [vmem:[%s0 + $0xc8] sm:$0xf]
    %v85 = vld [vmem:[%s0 + $0xcc] sm:$0xf]
    %v86 = vld [vmem:[%s0 + $0xd0] sm:$0xf]
    %v87 = vld [vmem:[%s0 + $0xd4] sm:$0xf]
    %v88 = vld [vmem:[%s0 + $0xd8] sm:$0xf]
    %v89 = vld [vmem:[%s0 + $0xdc] sm:$0xf]
    %v90 = vld [vmem:[%s0 + $0xe0] sm:$0xf]
    %v91 = vld [vmem:[%s0 + $0xe4] sm:$0xf]
    %v92 = vld [vmem:[%s0 + $0xe8] sm:$0xf]
    %v93 = vld [vmem:[%s0 + $0xec] sm:$0xf]
    %v94 = vld [vmem:[%s0 + $0xf0] sm:$0xf]
    %v95 = vld [vmem:[%s0 + $0xf4] sm:$0xf]
    %v96 = vld [vmem:[%s0 + $0xf8] sm:$0xf]
    %v97 = vld [vmem:[%s0 + $0xfc] sm:$0xf]
    %v98 = vld [vmem:[%s0 + $0x100] sm:$0xf]
    %v99 = vld [vmem:[%s0 + $0x104] sm:$0xf]
    %v100 = vld [vmem:[%s0 + $0x108] sm:$0xf]
    %v101 = vld [vmem:[%s0 + $0x10c] sm:$0xf]
    %v102 = vld [vmem:[%s0 + $0x110] sm:$0xf]
    %v103 = vld [vmem:[%s0 + $0x114] sm:$0xf]
    %v104 = vld [vmem:[%s0 + $0x118] sm:$0xf]
    %v105 = vld [vmem:[%s0 + $0x11c] sm:$0xf]
    %v106 = vld [vmem:[%s0 + $0x120] sm:$0xf]
    %v107 = vld [vmem:[%s0 + $0x124] sm:$0xf]
    %v108 = vld [vmem:[%s0 + $0x128] sm:$0xf]
    %v109 = vld [vmem:[%s0 + $0x12c] sm:$0xf]
    %v110 = vld [vmem:[%s0 + $0x130] sm:$0xf]
    %v111 = vld [vmem:[%s0 + $0x134] sm:$0xf]
    %v112 = vld [vmem:[%s0 + $0x138] sm:$0xf]
    %v113 = vld [vmem:[%s0 + $0x13c] sm:$0xf]
    %v114 = vld [vmem:[%s0 + $0x140] sm:$0xf]
    %v115 = vld [vmem:[%s0 + $0x144] sm:$0xf]
    %v116 = vld [vmem:[%s0 + $0x148] sm:$0xf]
    %v117 = vld [vmem:[%s0 + $0x14c] sm:$0xf]
    %v118 = vld [vmem:[%s0 + $0x150] sm:$0xf]
    %v119 = vld [vmem:[%s0 + $0x154] sm:$0xf]
    %v120 = vld [vmem:[%s0 + $0x158] sm:$0xf]
    %v121 = vld [vmem:[%s0 + $0x15c] sm:$0xf]
    %v122 = vld [vmem:[%s0 + $0x160] sm:$0xf]
    %v123 = vld [vmem:[%s0 + $0x164] sm:$0xf]
    %v124 = vld [vmem:[%s0 + $0x168] sm:$0xf]
    %v125 = vld [vmem:[%s0 + $0x16c] sm:$0xf]
    %v126 = vld [vmem:[%s0 + $0x170] sm:$0xf]
    %v127 = vld [vmem:[%s0 + $0x174] sm:$0xf]
    %v128 = vld [vmem:[%s0 + $0x178] sm:$0xf]
    %v129 = vld [vmem:[%s0 + $0x17c] sm:$0xf]
    %v130 = vld [vmem:[%s0 + $0x180] sm:$0xf]
    %v131 = vld [vmem:[%s0 + $0x184] sm:$0xf]
    %v132 = vld [vmem:[%s0 + $0x188] sm:$0xf]
    %v133 = vld [vmem:[%s0 + $0x18c] sm:$0xf]
    %v134 = vld [vmem:[%s0 + $0x190] sm:$0xf]
    %v135 = vld [vmem:[%s0 + $0x194] sm:$0xf]
    %v136 = vld [vmem:[%s0 + $0x198] sm:$0xf]
    %v137 = vld [vmem:[%s0 + $0x19c] sm:$0xf]
    %v138 = vld [vmem:[%s0 + $0x1a0] sm:$0xf]
    %v139 = vld [vmem:[%s0 + $0x1a4] sm:$0xf]
    %v140 = vld [vmem:[%s0 + $0x1a8] sm:$0xf]
    %v141 = vld [vmem:[%s0 + $0x1ac] sm:$0xf]
    %v142 = vld [vmem:[%s0 + $0x1b0] sm:$0xf]
    %v143 = vld [vmem:[%s0 + $0x1b4] sm:$0xf]
    %v144 = vld [vmem:[%s0 + $0x1b8] sm:$0xf]
    %v145 = vld [vmem:[%s0 + $0x1bc] sm:$0xf]
    %v146 = vld [vmem:[%s0 + $0x1c0] sm:$0xf]
    %v147 = vld [vmem:[%s0 + $0x1c4] sm:$0xf]
    %v148 = vld [vmem:[%s0 + $0x1c8] sm:$0xf]
    %v149 = vld [vmem:[%s0 + $0x1cc] sm:$0xf]
    %v150 = vld [vmem:[%s0 + $0x1d0] sm:$0xf]
    %v151 = vld [vmem:[%s0 + $0x1d4] sm:$0xf]
    %v152 = vld [vmem:[%s0 + $0x1d8] sm:$0xf]
    %v153 = vld [vmem:[%s0 + $0x1dc] sm:$0xf]
    %v154 = vld [vmem:[%s0 + $0x1e0] sm:$0xf]
    %v155 = vld [vmem:[%s0 + $0x1e4] sm:$0xf]
    %v156 = vld [vmem:[%s0 + $0x1e8] sm:$0xf]
    %v157 = vld [vmem:[%s0 + $0x1ec] sm:$0xf]
    %v158 = vld [vmem:[%s0 + $0x1f0] sm:$0xf]
    %v159 = vld [vmem:[%s0 + $0x1f4] sm:$0xf]
    %v160 = vld [vmem:[%s0 + $0x1f8] sm:$0xf]
    %v161 = vld [vmem:[%s0 + $0x1fc] sm:$0xf]
    %v162 = vld [vmem:[%s0 + $0x200] sm:$0xf]
    %v163 = vld [vmem:[%s0 + $0x204] sm:$0xf]
    %v164 = vld [vmem:[%s0 + $0x208] sm:$0xf]
    %v165 = vld [vmem:[%s0 + $0x20c] sm:$0xf]
    %v166 = vld [vmem:[%s0 + $0x210] sm:$0xf]
    %v167 = vld [vmem:[%s0 + $0x214] sm:$0xf]
    %v168 = vld [vmem:[%s0 + $0x218] sm:$0xf]
    %v169 = vld [vmem:[%s0 + $0x21c] sm:$0xf]
    %v170 = vld [vmem:[%s0 + $0x220] sm:$0xf]
    %v171 = vld [vmem:[%s0 + $0x224] sm:$0xf]
    %v172 = vld [vmem:[%s0 + $0x228] sm:$0xf]
    %v173 = vld [vmem:[%s0 + $0x22c] sm:$0xf]
    %v174 = vld [vmem:[%s0 + $0x230] sm:$0xf]
    %v175 = vld [vmem:[%s0 + $0x234] sm:$0xf]
    %v176 = vld [vmem:[%s0 + $0x238] sm:$0xf]
    %v177 = vld [vmem:[%s0 + $0x23c] sm:$0xf]
    %v178 = vld [vmem:[%s0 + $0x240] sm:$0xf]
    %v179 = vld [vmem:[%s0 + $0x244] sm:$0xf]
    %v180 = vld [vmem:[%s0 + $0x248] sm:$0xf]
    %v181 = vld [vmem:[%s0 + $0x24c] sm:$0xf]
    %v182 = vld [vmem:[%s0 + $0x250] sm:$0xf]
    %v183 = vld [vmem:[%s0 + $0x254] sm:$0xf]
    %v184 = vld [vmem:[%s0 + $0x258] sm:$0xf]
    %v185 = vld [vmem:[%s0 + $0x25c] sm:$0xf]
    %v186 = vld [vmem:[%s0 + $0x260] sm:$0xf]
    %v187 = vld [vmem:[%s0 + $0x264] sm:$0xf]
    %v188 = vld [vmem:[%s0 + $0x268] sm:$0xf]
    %v189 = vld [vmem:[%s0 + $0x26c] sm:$0xf]
    %v190 = vld [vmem:[%s0 + $0x270] sm:$0xf]
    %v191 = vld [vmem:[%s0 + $0x274] sm:$0xf]
    %v192 = vld [vmem:[%s0 + $0x278] sm:$0xf]
    %v193 = vld [vmem:[%s0 + $0x27c] sm:$0xf]
    %v194 = vld [vmem:[%s0 + $0x280] sm:$0xf]
    %v195 = vld [vmem:[%s0 + $0x284] sm:$0xf]
    %v196 = vld [vmem:[%s0 + $0x288] sm:$0xf]
    %v197 = vld [vmem:[%s0 + $0x28c] sm:$0xf]
    %v198 = vld [vmem:[%s0 + $0x290] sm:$0xf]
    %v199 = vld [vmem:[%s0 + $0x294] sm:$0xf]
    %v200 = vld [vmem:[%s0 + $0x298] sm:$0xf]
    %v201 = vld [vmem:[%s0 + $0x29c] sm:$0xf]
    %v202 = vld [vmem:[%s0 + $0x2a0] sm:$0xf]
    %v203 = vld [vmem:[%s0 + $0x2a4] sm:$0xf]
    %v204 = vld [vmem:[%s0 + $0x2a8] sm:$0xf]
    %v205 = vld [vmem:[%s0 + $0x2ac] sm:$0xf]
    %v206 = vld [vmem:[%s0 + $0x2b0] sm:$0xf]
    %v207 = vld [vmem:[%s0 + $0x2b4] sm:$0xf]
    %v208 = vld [vmem:[%s0 + $0x2b8] sm:$0xf]
    %v209 = vld [vmem:[%s0 + $0x2bc] sm:$0xf]
    %v210 = vld [vmem:[%s0 + $0x2c0] sm:$0xf]
    %v211 = vld [vmem:[%s0 + $0x2c4] sm:$0xf]
    %v212 = vld [vmem:[%s0 + $0x2c8] sm:$0xf]
    %v213 = vld [vmem:[%s0 + $0x2cc] sm:$0xf]
    %v214 = vld [vmem:[%s0 + $0x2d0] sm:$0xf]
    %v215 = vld [vmem:[%s0 + $0x2d4] sm:$0xf]
    %v216 = vld [vmem:[%s0 + $0x2d8] sm:$0xf]
    %v217 = vld [vmem:[%s0 + $0x2dc] sm:$0xf]
    %v218 = vld [vmem:[%s0 + $0x2e0] sm:$0xf]
    %v219 = vld [vmem:[%s0 + $0x2e4] sm:$0xf]
    %v220 = vld [vmem:[%s0 + $0x2e8] sm:$0xf]
    %v221 = vld [vmem:[%s0 + $0x2ec] sm:$0xf]
    %v222 = vld [vmem:[%s0 + $0x2f0] sm:$0xf]
    %v223 = vld [vmem:[%s0 + $0x2f4] sm:$0xf]
    %v224 = vld [vmem:[%s0 + $0x2f8] sm:$0xf]
    %v225 = vld [vmem:[%s0 + $0x2fc] sm:$0xf]
    %v226 = vld [vmem:[%s0 + $0x300] sm:$0xf]
    %v227 = vld [vmem:[%s0 + $0x304] sm:$0xf]
    %v228 = vld [vmem:[%s0 + $0x308] sm:$0xf]
    %v229 = vld [vmem:[%s0 + $0x30c] sm:$0xf]
    %v230 = vld [vmem:[%s0 + $0x310] sm:$0xf]
    %v231 = vld [vmem:[%s0 + $0x314] sm:$0xf]
    %v232 = vld [vmem:[%s0 + $0x318] sm:$0xf]
    %v233 = vld [vmem:[%s0 + $0x31c] sm:$0xf]
    %v234 = vld [vmem:[%s0 + $0x320] sm:$0xf]
    %v235 = vld [vmem:[%s0 + $0x324] sm:$0xf]
    %v236 = vld [vmem:[%s0 + $0x328] sm:$0xf]
    %v237 = vld [vmem:[%s0 + $0x32c] sm:$0xf]
    %v238 = vld [vmem:[%s0 + $0x330] sm:$0xf]
    %v239 = vld [vmem:[%s0 + $0x334] sm:$0xf]
    %v240 = vld [vmem:[%s0 + $0x338] sm:$0xf]
    %v241 = vld [vmem:[%s0 + $0x33c] sm:$0xf]
    %v242 = vld [vmem:[%s0 + $0x340] sm:$0xf]
    %v243 = vld [vmem:[%s0 + $0x344] sm:$0xf]
    %v244 = vld [vmem:[%s0 + $0x348] sm:$0xf]
    %v245 = vld [vmem:[%s0 + $0x34c] sm:$0xf]
    %v246 = vld [vmem:[%s0 + $0x350] sm:$0xf]
    %v247 = vld [vmem:[%s0 + $0x354] sm:$0xf]
    %v248 = vld [vmem:[%s0 + $0x358] sm:$0xf]
    %v249 = vld [vmem:[%s0 + $0x35c] sm:$0xf]
    %v250 = vld [vmem:[%s0 + $0x360] sm:$0xf]
    %v251 = vld [vmem:[%s0 + $0x364] sm:$0xf]
    %v252 = vld [vmem:[%s0 + $0x368] sm:$0xf]
    %v253 = vld [vmem:[%s0 + $0x36c] sm:$0xf]
    %v254 = vld [vmem:[%s0 + $0x370] sm:$0xf]
    %v255 = vld [vmem:[%s0 + $0x374] sm:$0xf]
    %v256 = vld [vmem:[%s0 + $0x378] sm:$0xf]
    %v257 = vld [vmem:[%s0 + $0x37c] sm:$0xf]
    %v258 = vld [vmem:[%s0 + $0x380] sm:$0xf]
    %v259 = vld [vmem:[%s0 + $0x384] sm:$0xf]
    %v260 = vld [vmem:[%s0 + $0x388] sm:$0xf]
    %v261 = vld [vmem:[%s0 + $0x38c] sm:$0xf]
    %v262 = vld [vmem:[%s0 + $0x390] sm:$0xf]
    %v263 = vld [vmem:[%s0 + $0x394] sm:$0xf]
    %v264 = vld [vmem:[%s0 + $0x398] sm:$0xf]
    %v265 = vld [vmem:[%s0 + $0x39c] sm:$0xf]
    %v266 = vld [vmem:[%s0 + $0x3a0] sm:$0xf]
    %v267 = vld [vmem:[%s0 + $0x3a4] sm:$0xf]
    %v268 = vld [vmem:[%s0 + $0x3a8] sm:$0xf]
    %v269 = vld [vmem:[%s0 + $0x3ac] sm:$0xf]
    %v270 = vld [vmem:[%s0 + $0x3b0] sm:$0xf]
    %v271 = vld [vmem:[%s0 + $0x3b4] sm:$0xf]
    %v272 = vld [vmem:[%s0 + $0x3b8] sm:$0xf]
    %v273 = vld [vmem:[%s0 + $0x3bc] sm:$0xf]
    %v274 = vld [vmem:[%s0 + $0x3c0] sm:$0xf]
    %v275 = vld [vmem:[%s0 + $0x3c4] sm:$0xf]
    %v276 = vld [vmem:[%s0 + $0x3c8] sm:$0xf]
    %v277 = vld [vmem:[%s0 + $0x3cc] sm:$0xf]
    %v278 = vld [vmem:[%s0 + $0x3d0] sm:$0xf]
    %v279 = vld [vmem:[%s0 + $0x3d4] sm:$0xf]
    %v280 = vld [vmem:[%s0 + $0x3d8] sm:$0xf]
    %v281 = vld [vmem:[%s0 + $0x3dc] sm:$0xf]
    %v282 = vld [vmem:[%s0 + $0x3e0] sm:$0xf]
    %v283 = vld [vmem:[%s0 + $0x3e4] sm:$0xf]
    %v284 = vld [vmem:[%s0 + $0x3e8] sm:$0xf]
    %v285 = vld [vmem:[%s0 + $0x3ec] sm:$0xf]
    %v286 = vld [vmem:[%s0 + $0x3f0] sm:$0xf]
    %v287 = vld [vmem:[%s0 + $0x3f4] sm:$0xf]
    %v288 = vld [vmem:[%s0 + $0x3f8] sm:$0xf]
    %v289 = vld [vmem:[%s0 + $0x3fc] sm:$0xf]
    %v290 = vunpack.c.l.bf16 %v34
    %v291 = vunpack.c.l.bf16 %v35
    %v292 = vunpack.c.l.bf16 %v36
    %v293 = vunpack.c.l.bf16 %v37
    %v294 = vunpack.c.l.bf16 %v38
    %v295 = vunpack.c.l.bf16 %v39
    %v296 = vunpack.c.l.bf16 %v40
    %v297 = vunpack.c.l.bf16 %v41
    %v298 = vunpack.c.l.bf16 %v42
    %v299 = vunpack.c.l.bf16 %v43
    %v300 = vunpack.c.l.bf16 %v44
    %v301 = vunpack.c.l.bf16 %v45
    %v302 = vunpack.c.l.bf16 %v46
    %v303 = vunpack.c.l.bf16 %v47
    %v304 = vunpack.c.l.bf16 %v48
    %v305 = vunpack.c.l.bf16 %v49
    %v306 = vunpack.c.l.bf16 %v50
    %v307 = vunpack.c.l.bf16 %v51
    %v308 = vunpack.c.l.bf16 %v52
    %v309 = vunpack.c.l.bf16 %v53
    %v310 = vunpack.c.l.bf16 %v54
    %v311 = vunpack.c.l.bf16 %v55
    %v312 = vunpack.c.l.bf16 %v56
    %v313 = vunpack.c.l.bf16 %v57
    %v314 = vunpack.c.l.bf16 %v58
    %v315 = vunpack.c.l.bf16 %v59
    %v316 = vunpack.c.l.bf16 %v60
    %v317 = vunpack.c.l.bf16 %v61
    %v318 = vunpack.c.l.bf16 %v62
    %v319 = vunpack.c.l.bf16 %v63
    %v320 = vunpack.c.l.bf16 %v64
    %v321 = vunpack.c.l.bf16 %v65
    %v322 = vunpack.c.l.bf16 %v66
    %v323 = vunpack.c.l.bf16 %v67
    %v324 = vunpack.c.l.bf16 %v68
    %v325 = vunpack.c.l.bf16 %v69
    %v326 = vunpack.c.l.bf16 %v70
    %v327 = vunpack.c.l.bf16 %v71
    %v328 = vunpack.c.l.bf16 %v72
    %v329 = vunpack.c.l.bf16 %v73
    %v330 = vunpack.c.l.bf16 %v74
    %v331 = vunpack.c.l.bf16 %v75
    %v332 = vunpack.c.l.bf16 %v76
    %v333 = vunpack.c.l.bf16 %v77
    %v334 = vunpack.c.l.bf16 %v78
    %v335 = vunpack.c.l.bf16 %v79
    %v336 = vunpack.c.l.bf16 %v80
    %v337 = vunpack.c.l.bf16 %v81
    %v338 = vunpack.c.l.bf16 %v82
    %v339 = vunpack.c.l.bf16 %v83
    %v340 = vunpack.c.l.bf16 %v84
    %v341 = vunpack.c.l.bf16 %v85
    %v342 = vunpack.c.l.bf16 %v86
    %v343 = vunpack.c.l.bf16 %v87
    %v344 = vunpack.c.l.bf16 %v88
    %v345 = vunpack.c.l.bf16 %v89
    %v346 = vunpack.c.l.bf16 %v90
    %v347 = vunpack.c.l.bf16 %v91
    %v348 = vunpack.c.l.bf16 %v92
    %v349 = vunpack.c.l.bf16 %v93
    %v350 = vunpack.c.l.bf16 %v94
    %v351 = vunpack.c.l.bf16 %v95
    %v352 = vunpack.c.l.bf16 %v96
    %v353 = vunpack.c.l.bf16 %v97
    %v354 = vunpack.c.l.bf16 %v98
    %v355 = vunpack.c.l.bf16 %v99
    %v356 = vunpack.c.l.bf16 %v100
    %v357 = vunpack.c.l.bf16 %v101
    %v358 = vunpack.c.l.bf16 %v102
    %v359 = vunpack.c.l.bf16 %v103
    %v360 = vunpack.c.l.bf16 %v104
    %v361 = vunpack.c.l.bf16 %v105
    %v362 = vunpack.c.l.bf16 %v106
    %v363 = vunpack.c.l.bf16 %v107
    %v364 = vunpack.c.l.bf16 %v108
    %v365 = vunpack.c.l.bf16 %v109
    %v366 = vunpack.c.l.bf16 %v110
    %v367 = vunpack.c.l.bf16 %v111
    %v368 = vunpack.c.l.bf16 %v112
    %v369 = vunpack.c.l.bf16 %v113
    %v370 = vunpack.c.l.bf16 %v114
    %v371 = vunpack.c.l.bf16 %v115
    %v372 = vunpack.c.l.bf16 %v116
    %v373 = vunpack.c.l.bf16 %v117
    %v374 = vunpack.c.l.bf16 %v118
    %v375 = vunpack.c.l.bf16 %v119
    %v376 = vunpack.c.l.bf16 %v120
    %v377 = vunpack.c.l.bf16 %v121
    %v378 = vunpack.c.l.bf16 %v122
    %v379 = vunpack.c.l.bf16 %v123
    %v380 = vunpack.c.l.bf16 %v124
    %v381 = vunpack.c.l.bf16 %v125
    %v382 = vunpack.c.l.bf16 %v126
    %v383 = vunpack.c.l.bf16 %v127
    %v384 = vunpack.c.l.bf16 %v128
    %v385 = vunpack.c.l.bf16 %v129
    %v386 = vunpack.c.l.bf16 %v130
    %v387 = vunpack.c.l.bf16 %v131
    %v388 = vunpack.c.l.bf16 %v132
    %v389 = vunpack.c.l.bf16 %v133
    %v390 = vunpack.c.l.bf16 %v134
    %v391 = vunpack.c.l.bf16 %v135
    %v392 = vunpack.c.l.bf16 %v136
    %v393 = vunpack.c.l.bf16 %v137
    %v394 = vunpack.c.l.bf16 %v138
    %v395 = vunpack.c.l.bf16 %v139
    %v396 = vunpack.c.l.bf16 %v140
    %v397 = vunpack.c.l.bf16 %v141
    %v398 = vunpack.c.l.bf16 %v142
    %v399 = vunpack.c.l.bf16 %v143
    %v400 = vunpack.c.l.bf16 %v144
    %v401 = vunpack.c.l.bf16 %v145
    %v402 = vunpack.c.l.bf16 %v146
    %v403 = vunpack.c.l.bf16 %v147
    %v404 = vunpack.c.l.bf16 %v148
    %v405 = vunpack.c.l.bf16 %v149
    %v406 = vunpack.c.l.bf16 %v150
    %v407 = vunpack.c.l.bf16 %v151
    %v408 = vunpack.c.l.bf16 %v152
    %v409 = vunpack.c.l.bf16 %v153
    %v410 = vunpack.c.l.bf16 %v154
    %v411 = vunpack.c.l.bf16 %v155
    %v412 = vunpack.c.l.bf16 %v156
    %v413 = vunpack.c.l.bf16 %v157
    %v414 = vunpack.c.l.bf16 %v158
    %v415 = vunpack.c.l.bf16 %v159
    %v416 = vunpack.c.l.bf16 %v160
    %v417 = vunpack.c.l.bf16 %v161
    %v418 = vunpack.c.l.bf16 %v162
    %v419 = vunpack.c.l.bf16 %v163
    %v420 = vunpack.c.l.bf16 %v164
    %v421 = vunpack.c.l.bf16 %v165
    %v422 = vunpack.c.l.bf16 %v166
    %v423 = vunpack.c.l.bf16 %v167
    %v424 = vunpack.c.l.bf16 %v168
    %v425 = vunpack.c.l.bf16 %v169
    %v426 = vunpack.c.l.bf16 %v170
    %v427 = vunpack.c.l.bf16 %v171
    %v428 = vunpack.c.l.bf16 %v172
    %v429 = vunpack.c.l.bf16 %v173
    %v430 = vunpack.c.l.bf16 %v174
    %v431 = vunpack.c.l.bf16 %v175
    %v432 = vunpack.c.l.bf16 %v176
    %v433 = vunpack.c.l.bf16 %v177
    %v434 = vunpack.c.l.bf16 %v178
    %v435 = vunpack.c.l.bf16 %v179
    %v436 = vunpack.c.l.bf16 %v180
    %v437 = vunpack.c.l.bf16 %v181
    %v438 = vunpack.c.l.bf16 %v182
    %v439 = vunpack.c.l.bf16 %v183
    %v440 = vunpack.c.l.bf16 %v184
    %v441 = vunpack.c.l.bf16 %v185
    %v442 = vunpack.c.l.bf16 %v186
    %v443 = vunpack.c.l.bf16 %v187
    %v444 = vunpack.c.l.bf16 %v188
    %v445 = vunpack.c.l.bf16 %v189
    %v446 = vunpack.c.l.bf16 %v190
    %v447 = vunpack.c.l.bf16 %v191
    %v448 = vunpack.c.l.bf16 %v192
    %v449 = vunpack.c.l.bf16 %v193
    %v450 = vunpack.c.l.bf16 %v194
    %v451 = vunpack.c.l.bf16 %v195
    %v452 = vunpack.c.l.bf16 %v196
    %v453 = vunpack.c.l.bf16 %v197
    %v454 = vunpack.c.l.bf16 %v198
    %v455 = vunpack.c.l.bf16 %v199
    %v456 = vunpack.c.l.bf16 %v200
    %v457 = vunpack.c.l.bf16 %v201
    %v458 = vunpack.c.l.bf16 %v202
    %v459 = vunpack.c.l.bf16 %v203
    %v460 = vunpack.c.l.bf16 %v204
    %v461 = vunpack.c.l.bf16 %v205
    %v462 = vunpack.c.l.bf16 %v206
    %v463 = vunpack.c.l.bf16 %v207
    %v464 = vunpack.c.l.bf16 %v208
    %v465 = vunpack.c.l.bf16 %v209
    %v466 = vunpack.c.l.bf16 %v210
    %v467 = vunpack.c.l.bf16 %v211
    %v468 = vunpack.c.l.bf16 %v212
    %v469 = vunpack.c.l.bf16 %v213
    %v470 = vunpack.c.l.bf16 %v214
    %v471 = vunpack.c.l.bf16 %v215
    %v472 = vunpack.c.l.bf16 %v216
    %v473 = vunpack.c.l.bf16 %v217
    %v474 = vunpack.c.l.bf16 %v218
    %v475 = vunpack.c.l.bf16 %v219
    %v476 = vunpack.c.l.bf16 %v220
    %v477 = vunpack.c.l.bf16 %v221
    %v478 = vunpack.c.l.bf16 %v222
    %v479 = vunpack.c.l.bf16 %v223
    %v480 = vunpack.c.l.bf16 %v224
    %v481 = vunpack.c.l.bf16 %v225
    %v482 = vunpack.c.l.bf16 %v226
    %v483 = vunpack.c.l.bf16 %v227
    %v484 = vunpack.c.l.bf16 %v228
    %v485 = vunpack.c.l.bf16 %v229
    %v486 = vunpack.c.l.bf16 %v230
    %v487 = vunpack.c.l.bf16 %v231
    %v488 = vunpack.c.l.bf16 %v232
    %v489 = vunpack.c.l.bf16 %v233
    %v490 = vunpack.c.l.bf16 %v234
    %v491 = vunpack.c.l.bf16 %v235
    %v492 = vunpack.c.l.bf16 %v236
    %v493 = vunpack.c.l.bf16 %v237
    %v494 = vunpack.c.l.bf16 %v238
    %v495 = vunpack.c.l.bf16 %v239
    %v496 = vunpack.c.l.bf16 %v240
    %v497 = vunpack.c.l.bf16 %v241
    %v498 = vunpack.c.l.bf16 %v242
    %v499 = vunpack.c.l.bf16 %v243
    %v500 = vunpack.c.l.bf16 %v244
    %v501 = vunpack.c.l.bf16 %v245
    %v502 = vunpack.c.l.bf16 %v246
    %v503 = vunpack.c.l.bf16 %v247
    %v504 = vunpack.c.l.bf16 %v248
    %v505 = vunpack.c.l.bf16 %v249
    %v506 = vunpack.c.l.bf16 %v250
    %v507 = vunpack.c.l.bf16 %v251
    %v508 = vunpack.c.l.bf16 %v252
    %v509 = vunpack.c.l.bf16 %v253
    %v510 = vunpack.c.l.bf16 %v254
    %v511 = vunpack.c.l.bf16 %v255
    %v512 = vunpack.c.l.bf16 %v256
    %v513 = vunpack.c.l.bf16 %v257
    %v514 = vunpack.c.l.bf16 %v258
    %v515 = vunpack.c.l.bf16 %v259
    %v516 = vunpack.c.l.bf16 %v260
    %v517 = vunpack.c.l.bf16 %v261
    %v518 = vunpack.c.l.bf16 %v262
    %v519 = vunpack.c.l.bf16 %v263
    %v520 = vunpack.c.l.bf16 %v264
    %v521 = vunpack.c.l.bf16 %v265
    %v522 = vunpack.c.l.bf16 %v266
    %v523 = vunpack.c.l.bf16 %v267
    %v524 = vunpack.c.l.bf16 %v268
    %v525 = vunpack.c.l.bf16 %v269
    %v526 = vunpack.c.l.bf16 %v270
    %v527 = vunpack.c.l.bf16 %v271
    %v528 = vunpack.c.l.bf16 %v272
    %v529 = vunpack.c.l.bf16 %v273
    %v530 = vunpack.c.l.bf16 %v274
    %v531 = vunpack.c.l.bf16 %v275
    %v532 = vunpack.c.l.bf16 %v276
    %v533 = vunpack.c.l.bf16 %v277
    %v534 = vunpack.c.l.bf16 %v278
    %v535 = vunpack.c.l.bf16 %v279
    %v536 = vunpack.c.l.bf16 %v280
    %v537 = vunpack.c.l.bf16 %v281
    %v538 = vunpack.c.l.bf16 %v282
    %v539 = vunpack.c.l.bf16 %v283
    %v540 = vunpack.c.l.bf16 %v284
    %v541 = vunpack.c.l.bf16 %v285
    %v542 = vunpack.c.l.bf16 %v286
    %v543 = vunpack.c.l.bf16 %v287
    %v544 = vunpack.c.l.bf16 %v288
    %v545 = vunpack.c.l.bf16 %v289
    %vm546 = vcmask 130048
    %v547 = vsel %vm546, %v290, 0.0
    %v548 = vsel %vm546, %v291, 0.0
    %v549 = vadd.f32 %v547, %v548
    %v550 = vsel %vm546, %v292, 0.0
    %v551 = vadd.f32 %v549, %v550
    %v552 = vsel %vm546, %v293, 0.0
    %v553 = vadd.f32 %v551, %v552
    %v554 = vsel %vm546, %v294, 0.0
    %v555 = vadd.f32 %v553, %v554
    %v556 = vsel %vm546, %v295, 0.0
    %v557 = vadd.f32 %v555, %v556
    %v558 = vsel %vm546, %v296, 0.0
    %v559 = vadd.f32 %v557, %v558
    %v560 = vsel %vm546, %v297, 0.0
    %v561 = vadd.f32 %v559, %v560
    %v562 = vsel %vm546, %v298, 0.0
    %v563 = vadd.f32 %v561, %v562
    %v564 = vsel %vm546, %v299, 0.0
    %v565 = vadd.f32 %v563, %v564
    %v566 = vsel %vm546, %v300, 0.0
    %v567 = vadd.f32 %v565, %v566
    %v568 = vsel %vm546, %v301, 0.0
    %v569 = vadd.f32 %v567, %v568
    %v570 = vsel %vm546, %v302, 0.0
    %v571 = vadd.f32 %v569, %v570
    %v572 = vsel %vm546, %v303, 0.0
    %v573 = vadd.f32 %v571, %v572
    %v574 = vsel %vm546, %v304, 0.0
    %v575 = vadd.f32 %v573, %v574
    %v576 = vsel %vm546, %v305, 0.0
    %v577 = vadd.f32 %v575, %v576
    %v578 = vsel %vm546, %v306, 0.0
    %v579 = vadd.f32 %v577, %v578
    %v580 = vsel %vm546, %v307, 0.0
    %v581 = vadd.f32 %v579, %v580
    %v582 = vsel %vm546, %v308, 0.0
    %v583 = vadd.f32 %v581, %v582
    %v584 = vsel %vm546, %v309, 0.0
    %v585 = vadd.f32 %v583, %v584
    %v586 = vsel %vm546, %v310, 0.0
    %v587 = vadd.f32 %v585, %v586
    %v588 = vsel %vm546, %v311, 0.0
    %v589 = vadd.f32 %v587, %v588
    %v590 = vsel %vm546, %v312, 0.0
    %v591 = vadd.f32 %v589, %v590
    %v592 = vsel %vm546, %v313, 0.0
    %v593 = vadd.f32 %v591, %v592
    %v594 = vsel %vm546, %v314, 0.0
    %v595 = vadd.f32 %v593, %v594
    %v596 = vsel %vm546, %v315, 0.0
    %v597 = vadd.f32 %v595, %v596
    %v598 = vsel %vm546, %v316, 0.0
    %v599 = vadd.f32 %v597, %v598
    %v600 = vsel %vm546, %v317, 0.0
    %v601 = vadd.f32 %v599, %v600
    %v602 = vsel %vm546, %v318, 0.0
    %v603 = vadd.f32 %v601, %v602
    %v604 = vsel %vm546, %v319, 0.0
    %v605 = vadd.f32 %v603, %v604
    %v606 = vsel %vm546, %v320, 0.0
    %v607 = vadd.f32 %v605, %v606
    %v608 = vsel %vm546, %v321, 0.0
    %v609 = vadd.f32 %v607, %v608
    %v610 = vrot.slane %v609, 4
    %v611 = vadd.f32 %v609, %v610
    %v612 = vrot.slane %v611, 2
    %v613 = vadd.f32 %v611, %v612
    %v614 = vrot.slane %v613, 1
    %v615 = vadd.f32 %v613, %v614
    %v616 = vsel %vm546, %v322, 0.0
    %v617 = vsel %vm546, %v323, 0.0
    %v618 = vadd.f32 %v616, %v617
    %v619 = vsel %vm546, %v324, 0.0
    %v620 = vadd.f32 %v618, %v619
    %v621 = vsel %vm546, %v325, 0.0
    %v622 = vadd.f32 %v620, %v621
    %v623 = vsel %vm546, %v326, 0.0
    %v624 = vadd.f32 %v622, %v623
    %v625 = vsel %vm546, %v327, 0.0
    %v626 = vadd.f32 %v624, %v625
    %v627 = vsel %vm546, %v328, 0.0
    %v628 = vadd.f32 %v626, %v627
    %v629 = vsel %vm546, %v329, 0.0
    %v630 = vadd.f32 %v628, %v629
    %v631 = vsel %vm546, %v330, 0.0
    %v632 = vadd.f32 %v630, %v631
    %v633 = vsel %vm546, %v331, 0.0
    %v634 = vadd.f32 %v632, %v633
    %v635 = vsel %vm546, %v332, 0.0
    %v636 = vadd.f32 %v634, %v635
    %v637 = vsel %vm546, %v333, 0.0
    %v638 = vadd.f32 %v636, %v637
    %v639 = vsel %vm546, %v334, 0.0
    %v640 = vadd.f32 %v638, %v639
    %v641 = vsel %vm546, %v335, 0.0
    %v642 = vadd.f32 %v640, %v641
    %v643 = vsel %vm546, %v336, 0.0
    %v644 = vadd.f32 %v642, %v643
    %v645 = vsel %vm546, %v337, 0.0
    %v646 = vadd.f32 %v644, %v645
    %v647 = vsel %vm546, %v338, 0.0
    %v648 = vadd.f32 %v646, %v647
    %v649 = vsel %vm546, %v339, 0.0
    %v650 = vadd.f32 %v648, %v649
    %v651 = vsel %vm546, %v340, 0.0
    %v652 = vadd.f32 %v650, %v651
    %v653 = vsel %vm546, %v341, 0.0
    %v654 = vadd.f32 %v652, %v653
    %v655 = vsel %vm546, %v342, 0.0
    %v656 = vadd.f32 %v654, %v655
    %v657 = vsel %vm546, %v343, 0.0
    %v658 = vadd.f32 %v656, %v657
    %v659 = vsel %vm546, %v344, 0.0
    %v660 = vadd.f32 %v658, %v659
    %v661 = vsel %vm546, %v345, 0.0
    %v662 = vadd.f32 %v660, %v661
    %v663 = vsel %vm546, %v346, 0.0
    %v664 = vadd.f32 %v662, %v663
    %v665 = vsel %vm546, %v347, 0.0
    %v666 = vadd.f32 %v664, %v665
    %v667 = vsel %vm546, %v348, 0.0
    %v668 = vadd.f32 %v666, %v667
    %v669 = vsel %vm546, %v349, 0.0
    %v670 = vadd.f32 %v668, %v669
    %v671 = vsel %vm546, %v350, 0.0
    %v672 = vadd.f32 %v670, %v671
    %v673 = vsel %vm546, %v351, 0.0
    %v674 = vadd.f32 %v672, %v673
    %v675 = vsel %vm546, %v352, 0.0
    %v676 = vadd.f32 %v674, %v675
    %v677 = vsel %vm546, %v353, 0.0
    %v678 = vadd.f32 %v676, %v677
    %v679 = vrot.slane %v678, 4
    %v680 = vadd.f32 %v678, %v679
    %v681 = vrot.slane %v680, 2
    %v682 = vadd.f32 %v680, %v681
    %v683 = vrot.slane %v682, 1
    %v684 = vadd.f32 %v682, %v683
    %v685 = vsel %vm546, %v354, 0.0
    %v686 = vsel %vm546, %v355, 0.0
    %v687 = vadd.f32 %v685, %v686
    %v688 = vsel %vm546, %v356, 0.0
    %v689 = vadd.f32 %v687, %v688
    %v690 = vsel %vm546, %v357, 0.0
    %v691 = vadd.f32 %v689, %v690
    %v692 = vsel %vm546, %v358, 0.0
    %v693 = vadd.f32 %v691, %v692
    %v694 = vsel %vm546, %v359, 0.0
    %v695 = vadd.f32 %v693, %v694
    %v696 = vsel %vm546, %v360, 0.0
    %v697 = vadd.f32 %v695, %v696
    %v698 = vsel %vm546, %v361, 0.0
    %v699 = vadd.f32 %v697, %v698
    %v700 = vsel %vm546, %v362, 0.0
    %v701 = vadd.f32 %v699, %v700
    %v702 = vsel %vm546, %v363, 0.0
    %v703 = vadd.f32 %v701, %v702
    %v704 = vsel %vm546, %v364, 0.0
    %v705 = vadd.f32 %v703, %v704
    %v706 = vsel %vm546, %v365, 0.0
    %v707 = vadd.f32 %v705, %v706
    %v708 = vsel %vm546, %v366, 0.0
    %v709 = vadd.f32 %v707, %v708
    %v710 = vsel %vm546, %v367, 0.0
    %v711 = vadd.f32 %v709, %v710
    %v712 = vsel %vm546, %v368, 0.0
    %v713 = vadd.f32 %v711, %v712
    %v714 = vsel %vm546, %v369, 0.0
    %v715 = vadd.f32 %v713, %v714
    %v716 = vsel %vm546, %v370, 0.0
    %v717 = vadd.f32 %v715, %v716
    %v718 = vsel %vm546, %v371, 0.0
    %v719 = vadd.f32 %v717, %v718
    %v720 = vsel %vm546, %v372, 0.0
    %v721 = vadd.f32 %v719, %v720
    %v722 = vsel %vm546, %v373, 0.0
    %v723 = vadd.f32 %v721, %v722
    %v724 = vsel %vm546, %v374, 0.0
    %v725 = vadd.f32 %v723, %v724
    %v726 = vsel %vm546, %v375, 0.0
    %v727 = vadd.f32 %v725, %v726
    %v728 = vsel %vm546, %v376, 0.0
    %v729 = vadd.f32 %v727, %v728
    %v730 = vsel %vm546, %v377, 0.0
    %v731 = vadd.f32 %v729, %v730
    %v732 = vsel %vm546, %v378, 0.0
    %v733 = vadd.f32 %v731, %v732
    %v734 = vsel %vm546, %v379, 0.0
    %v735 = vadd.f32 %v733, %v734
    %v736 = vsel %vm546, %v380, 0.0
    %v737 = vadd.f32 %v735, %v736
    %v738 = vsel %vm546, %v381, 0.0
    %v739 = vadd.f32 %v737, %v738
    %v740 = vsel %vm546, %v382, 0.0
    %v741 = vadd.f32 %v739, %v740
    %v742 = vsel %vm546, %v383, 0.0
    %v743 = vadd.f32 %v741, %v742
    %v744 = vsel %vm546, %v384, 0.0
    %v745 = vadd.f32 %v743, %v744
    %v746 = vsel %vm546, %v385, 0.0
    %v747 = vadd.f32 %v745, %v746
    %v748 = vrot.slane %v747, 4
    %v749 = vadd.f32 %v747, %v748
    %v750 = vrot.slane %v749, 2
    %v751 = vadd.f32 %v749, %v750
    %v752 = vrot.slane %v751, 1
    %v753 = vadd.f32 %v751, %v752
    %v754 = vsel %vm546, %v386, 0.0
    %v755 = vsel %vm546, %v387, 0.0
    %v756 = vadd.f32 %v754, %v755
    %v757 = vsel %vm546, %v388, 0.0
    %v758 = vadd.f32 %v756, %v757
    %v759 = vsel %vm546, %v389, 0.0
    %v760 = vadd.f32 %v758, %v759
    %v761 = vsel %vm546, %v390, 0.0
    %v762 = vadd.f32 %v760, %v761
    %v763 = vsel %vm546, %v391, 0.0
    %v764 = vadd.f32 %v762, %v763
    %v765 = vsel %vm546, %v392, 0.0
    %v766 = vadd.f32 %v764, %v765
    %v767 = vsel %vm546, %v393, 0.0
    %v768 = vadd.f32 %v766, %v767
    %v769 = vsel %vm546, %v394, 0.0
    %v770 = vadd.f32 %v768, %v769
    %v771 = vsel %vm546, %v395, 0.0
    %v772 = vadd.f32 %v770, %v771
    %v773 = vsel %vm546, %v396, 0.0
    %v774 = vadd.f32 %v772, %v773
    %v775 = vsel %vm546, %v397, 0.0
    %v776 = vadd.f32 %v774, %v775
    %v777 = vsel %vm546, %v398, 0.0
    %v778 = vadd.f32 %v776, %v777
    %v779 = vsel %vm546, %v399, 0.0
    %v780 = vadd.f32 %v778, %v779
    %v781 = vsel %vm546, %v400, 0.0
    %v782 = vadd.f32 %v780, %v781
    %v783 = vsel %vm546, %v401, 0.0
    %v784 = vadd.f32 %v782, %v783
    %v785 = vsel %vm546, %v402, 0.0
    %v786 = vadd.f32 %v784, %v785
    %v787 = vsel %vm546, %v403, 0.0
    %v788 = vadd.f32 %v786, %v787
    %v789 = vsel %vm546, %v404, 0.0
    %v790 = vadd.f32 %v788, %v789
    %v791 = vsel %vm546, %v405, 0.0
    %v792 = vadd.f32 %v790, %v791
    %v793 = vsel %vm546, %v406, 0.0
    %v794 = vadd.f32 %v792, %v793
    %v795 = vsel %vm546, %v407, 0.0
    %v796 = vadd.f32 %v794, %v795
    %v797 = vsel %vm546, %v408, 0.0
    %v798 = vadd.f32 %v796, %v797
    %v799 = vsel %vm546, %v409, 0.0
    %v800 = vadd.f32 %v798, %v799
    %v801 = vsel %vm546, %v410, 0.0
    %v802 = vadd.f32 %v800, %v801
    %v803 = vsel %vm546, %v411, 0.0
    %v804 = vadd.f32 %v802, %v803
    %v805 = vsel %vm546, %v412, 0.0
    %v806 = vadd.f32 %v804, %v805
    %v807 = vsel %vm546, %v413, 0.0
    %v808 = vadd.f32 %v806, %v807
    %v809 = vsel %vm546, %v414, 0.0
    %v810 = vadd.f32 %v808, %v809
    %v811 = vsel %vm546, %v415, 0.0
    %v812 = vadd.f32 %v810, %v811
    %v813 = vsel %vm546, %v416, 0.0
    %v814 = vadd.f32 %v812, %v813
    %v815 = vsel %vm546, %v417, 0.0
    %v816 = vadd.f32 %v814, %v815
    %v817 = vrot.slane %v816, 4
    %v818 = vadd.f32 %v816, %v817
    %v819 = vrot.slane %v818, 2
    %v820 = vadd.f32 %v818, %v819
    %v821 = vrot.slane %v820, 1
    %v822 = vadd.f32 %v820, %v821
    %v823 = vsel %vm546, %v418, 0.0
    %v824 = vsel %vm546, %v419, 0.0
    %v825 = vadd.f32 %v823, %v824
    %v826 = vsel %vm546, %v420, 0.0
    %v827 = vadd.f32 %v825, %v826
    %v828 = vsel %vm546, %v421, 0.0
    %v829 = vadd.f32 %v827, %v828
    %v830 = vsel %vm546, %v422, 0.0
    %v831 = vadd.f32 %v829, %v830
    %v832 = vsel %vm546, %v423, 0.0
    %v833 = vadd.f32 %v831, %v832
    %v834 = vsel %vm546, %v424, 0.0
    %v835 = vadd.f32 %v833, %v834
    %v836 = vsel %vm546, %v425, 0.0
    %v837 = vadd.f32 %v835, %v836
    %v838 = vsel %vm546, %v426, 0.0
    %v839 = vadd.f32 %v837, %v838
    %v840 = vsel %vm546, %v427, 0.0
    %v841 = vadd.f32 %v839, %v840
    %v842 = vsel %vm546, %v428, 0.0
    %v843 = vadd.f32 %v841, %v842
    %v844 = vsel %vm546, %v429, 0.0
    %v845 = vadd.f32 %v843, %v844
    %v846 = vsel %vm546, %v430, 0.0
    %v847 = vadd.f32 %v845, %v846
    %v848 = vsel %vm546, %v431, 0.0
    %v849 = vadd.f32 %v847, %v848
    %v850 = vsel %vm546, %v432, 0.0
    %v851 = vadd.f32 %v849, %v850
    %v852 = vsel %vm546, %v433, 0.0
    %v853 = vadd.f32 %v851, %v852
    %v854 = vsel %vm546, %v434, 0.0
    %v855 = vadd.f32 %v853, %v854
    %v856 = vsel %vm546, %v435, 0.0
    %v857 = vadd.f32 %v855, %v856
    %v858 = vsel %vm546, %v436, 0.0
    %v859 = vadd.f32 %v857, %v858
    %v860 = vsel %vm546, %v437, 0.0
    %v861 = vadd.f32 %v859, %v860
    %v862 = vsel %vm546, %v438, 0.0
    %v863 = vadd.f32 %v861, %v862
    %v864 = vsel %vm546, %v439, 0.0
    %v865 = vadd.f32 %v863, %v864
    %v866 = vsel %vm546, %v440, 0.0
    %v867 = vadd.f32 %v865, %v866
    %v868 = vsel %vm546, %v441, 0.0
    %v869 = vadd.f32 %v867, %v868
    %v870 = vsel %vm546, %v442, 0.0
    %v871 = vadd.f32 %v869, %v870
    %v872 = vsel %vm546, %v443, 0.0
    %v873 = vadd.f32 %v871, %v872
    %v874 = vsel %vm546, %v444, 0.0
    %v875 = vadd.f32 %v873, %v874
    %v876 = vsel %vm546, %v445, 0.0
    %v877 = vadd.f32 %v875, %v876
    %v878 = vsel %vm546, %v446, 0.0
    %v879 = vadd.f32 %v877, %v878
    %v880 = vsel %vm546, %v447, 0.0
    %v881 = vadd.f32 %v879, %v880
    %v882 = vsel %vm546, %v448, 0.0
    %v883 = vadd.f32 %v881, %v882
    %v884 = vsel %vm546, %v449, 0.0
    %v885 = vadd.f32 %v883, %v884
    %v886 = vrot.slane %v885, 4
    %v887 = vadd.f32 %v885, %v886
    %v888 = vrot.slane %v887, 2
    %v889 = vadd.f32 %v887, %v888
    %v890 = vrot.slane %v889, 1
    %v891 = vadd.f32 %v889, %v890
    %v892 = vsel %vm546, %v450, 0.0
    %v893 = vsel %vm546, %v451, 0.0
    %v894 = vadd.f32 %v892, %v893
    %v895 = vsel %vm546, %v452, 0.0
    %v896 = vadd.f32 %v894, %v895
    %v897 = vsel %vm546, %v453, 0.0
    %v898 = vadd.f32 %v896, %v897
    %v899 = vsel %vm546, %v454, 0.0
    %v900 = vadd.f32 %v898, %v899
    %v901 = vsel %vm546, %v455, 0.0
    %v902 = vadd.f32 %v900, %v901
    %v903 = vsel %vm546, %v456, 0.0
    %v904 = vadd.f32 %v902, %v903
    %v905 = vsel %vm546, %v457, 0.0
    %v906 = vadd.f32 %v904, %v905
    %v907 = vsel %vm546, %v458, 0.0
    %v908 = vadd.f32 %v906, %v907
    %v909 = vsel %vm546, %v459, 0.0
    %v910 = vadd.f32 %v908, %v909
    %v911 = vsel %vm546, %v460, 0.0
    %v912 = vadd.f32 %v910, %v911
    %v913 = vsel %vm546, %v461, 0.0
    %v914 = vadd.f32 %v912, %v913
    %v915 = vsel %vm546, %v462, 0.0
    %v916 = vadd.f32 %v914, %v915
    %v917 = vsel %vm546, %v463, 0.0
    %v918 = vadd.f32 %v916, %v917
    %v919 = vsel %vm546, %v464, 0.0
    %v920 = vadd.f32 %v918, %v919
    %v921 = vsel %vm546, %v465, 0.0
    %v922 = vadd.f32 %v920, %v921
    %v923 = vsel %vm546, %v466, 0.0
    %v924 = vadd.f32 %v922, %v923
    %v925 = vsel %vm546, %v467, 0.0
    %v926 = vadd.f32 %v924, %v925
    %v927 = vsel %vm546, %v468, 0.0
    %v928 = vadd.f32 %v926, %v927
    %v929 = vsel %vm546, %v469, 0.0
    %v930 = vadd.f32 %v928, %v929
    %v931 = vsel %vm546, %v470, 0.0
    %v932 = vadd.f32 %v930, %v931
    %v933 = vsel %vm546, %v471, 0.0
    %v934 = vadd.f32 %v932, %v933
    %v935 = vsel %vm546, %v472, 0.0
    %v936 = vadd.f32 %v934, %v935
    %v937 = vsel %vm546, %v473, 0.0
    %v938 = vadd.f32 %v936, %v937
    %v939 = vsel %vm546, %v474, 0.0
    %v940 = vadd.f32 %v938, %v939
    %v941 = vsel %vm546, %v475, 0.0
    %v942 = vadd.f32 %v940, %v941
    %v943 = vsel %vm546, %v476, 0.0
    %v944 = vadd.f32 %v942, %v943
    %v945 = vsel %vm546, %v477, 0.0
    %v946 = vadd.f32 %v944, %v945
    %v947 = vsel %vm546, %v478, 0.0
    %v948 = vadd.f32 %v946, %v947
    %v949 = vsel %vm546, %v479, 0.0
    %v950 = vadd.f32 %v948, %v949
    %v951 = vsel %vm546, %v480, 0.0
    %v952 = vadd.f32 %v950, %v951
    %v953 = vsel %vm546, %v481, 0.0
    %v954 = vadd.f32 %v952, %v953
    %v955 = vrot.slane %v954, 4
    %v956 = vadd.f32 %v954, %v955
    %v957 = vrot.slane %v956, 2
    %v958 = vadd.f32 %v956, %v957
    %v959 = vrot.slane %v958, 1
    %v960 = vadd.f32 %v958, %v959
    %v961 = vsel %vm546, %v482, 0.0
    %v962 = vsel %vm546, %v483, 0.0
    %v963 = vadd.f32 %v961, %v962
    %v964 = vsel %vm546, %v484, 0.0
    %v965 = vadd.f32 %v963, %v964
    %v966 = vsel %vm546, %v485, 0.0
    %v967 = vadd.f32 %v965, %v966
    %v968 = vsel %vm546, %v486, 0.0
    %v969 = vadd.f32 %v967, %v968
    %v970 = vsel %vm546, %v487, 0.0
    %v971 = vadd.f32 %v969, %v970
    %v972 = vsel %vm546, %v488, 0.0
    %v973 = vadd.f32 %v971, %v972
    %v974 = vsel %vm546, %v489, 0.0
    %v975 = vadd.f32 %v973, %v974
    %v976 = vsel %vm546, %v490, 0.0
    %v977 = vadd.f32 %v975, %v976
    %v978 = vsel %vm546, %v491, 0.0
    %v979 = vadd.f32 %v977, %v978
    %v980 = vsel %vm546, %v492, 0.0
    %v981 = vadd.f32 %v979, %v980
    %v982 = vsel %vm546, %v493, 0.0
    %v983 = vadd.f32 %v981, %v982
    %v984 = vsel %vm546, %v494, 0.0
    %v985 = vadd.f32 %v983, %v984
    %v986 = vsel %vm546, %v495, 0.0
    %v987 = vadd.f32 %v985, %v986
    %v988 = vsel %vm546, %v496, 0.0
    %v989 = vadd.f32 %v987, %v988
    %v990 = vsel %vm546, %v497, 0.0
    %v991 = vadd.f32 %v989, %v990
    %v992 = vsel %vm546, %v498, 0.0
    %v993 = vadd.f32 %v991, %v992
    %v994 = vsel %vm546, %v499, 0.0
    %v995 = vadd.f32 %v993, %v994
    %v996 = vsel %vm546, %v500, 0.0
    %v997 = vadd.f32 %v995, %v996
    %v998 = vsel %vm546, %v501, 0.0
    %v999 = vadd.f32 %v997, %v998
    %v1000 = vsel %vm546, %v502, 0.0
    %v1001 = vadd.f32 %v999, %v1000
    %v1002 = vsel %vm546, %v503, 0.0
    %v1003 = vadd.f32 %v1001, %v1002
    %v1004 = vsel %vm546, %v504, 0.0
    %v1005 = vadd.f32 %v1003, %v1004
    %v1006 = vsel %vm546, %v505, 0.0
    %v1007 = vadd.f32 %v1005, %v1006
    %v1008 = vsel %vm546, %v506, 0.0
    %v1009 = vadd.f32 %v1007, %v1008
    %v1010 = vsel %vm546, %v507, 0.0
    %v1011 = vadd.f32 %v1009, %v1010
    %v1012 = vsel %vm546, %v508, 0.0
    %v1013 = vadd.f32 %v1011, %v1012
    %v1014 = vsel %vm546, %v509, 0.0
    %v1015 = vadd.f32 %v1013, %v1014
    %v1016 = vsel %vm546, %v510, 0.0
    %v1017 = vadd.f32 %v1015, %v1016
    %v1018 = vsel %vm546, %v511, 0.0
    %v1019 = vadd.f32 %v1017, %v1018
    %v1020 = vsel %vm546, %v512, 0.0
    %v1021 = vadd.f32 %v1019, %v1020
    %v1022 = vsel %vm546, %v513, 0.0
    %v1023 = vadd.f32 %v1021, %v1022
    %v1024 = vrot.slane %v1023, 4
    %v1025 = vadd.f32 %v1023, %v1024
    %v1026 = vrot.slane %v1025, 2
    %v1027 = vadd.f32 %v1025, %v1026
    %v1028 = vrot.slane %v1027, 1
    %v1029 = vadd.f32 %v1027, %v1028
    %v1030 = vsel %vm546, %v514, 0.0
    %v1031 = vsel %vm546, %v515, 0.0
    %v1032 = vadd.f32 %v1030, %v1031
    %v1033 = vsel %vm546, %v516, 0.0
    %v1034 = vadd.f32 %v1032, %v1033
    %v1035 = vsel %vm546, %v517, 0.0
    %v1036 = vadd.f32 %v1034, %v1035
    %v1037 = vsel %vm546, %v518, 0.0
    %v1038 = vadd.f32 %v1036, %v1037
    %v1039 = vsel %vm546, %v519, 0.0
    %v1040 = vadd.f32 %v1038, %v1039
    %v1041 = vsel %vm546, %v520, 0.0
    %v1042 = vadd.f32 %v1040, %v1041
    %v1043 = vsel %vm546, %v521, 0.0
    %v1044 = vadd.f32 %v1042, %v1043
    %v1045 = vsel %vm546, %v522, 0.0
    %v1046 = vadd.f32 %v1044, %v1045
    %v1047 = vsel %vm546, %v523, 0.0
    %v1048 = vadd.f32 %v1046, %v1047
    %v1049 = vsel %vm546, %v524, 0.0
    %v1050 = vadd.f32 %v1048, %v1049
    %v1051 = vsel %vm546, %v525, 0.0
    %v1052 = vadd.f32 %v1050, %v1051
    %v1053 = vsel %vm546, %v526, 0.0
    %v1054 = vadd.f32 %v1052, %v1053
    %v1055 = vsel %vm546, %v527, 0.0
    %v1056 = vadd.f32 %v1054, %v1055
    %v1057 = vsel %vm546, %v528, 0.0
    %v1058 = vadd.f32 %v1056, %v1057
    %v1059 = vsel %vm546, %v529, 0.0
    %v1060 = vadd.f32 %v1058, %v1059
    %v1061 = vsel %vm546, %v530, 0.0
    %v1062 = vadd.f32 %v1060, %v1061
    %v1063 = vsel %vm546, %v531, 0.0
    %v1064 = vadd.f32 %v1062, %v1063
    %v1065 = vsel %vm546, %v532, 0.0
    %v1066 = vadd.f32 %v1064, %v1065
    %v1067 = vsel %vm546, %v533, 0.0
    %v1068 = vadd.f32 %v1066, %v1067
    %v1069 = vsel %vm546, %v534, 0.0
    %v1070 = vadd.f32 %v1068, %v1069
    %v1071 = vsel %vm546, %v535, 0.0
    %v1072 = vadd.f32 %v1070, %v1071
    %v1073 = vsel %vm546, %v536, 0.0
    %v1074 = vadd.f32 %v1072, %v1073
    %v1075 = vsel %vm546, %v537, 0.0
    %v1076 = vadd.f32 %v1074, %v1075
    %v1077 = vsel %vm546, %v538, 0.0
    %v1078 = vadd.f32 %v1076, %v1077
    %v1079 = vsel %vm546, %v539, 0.0
    %v1080 = vadd.f32 %v1078, %v1079
    %v1081 = vsel %vm546, %v540, 0.0
    %v1082 = vadd.f32 %v1080, %v1081
    %v1083 = vsel %vm546, %v541, 0.0
    %v1084 = vadd.f32 %v1082, %v1083
    %v1085 = vsel %vm546, %v542, 0.0
    %v1086 = vadd.f32 %v1084, %v1085
    %v1087 = vsel %vm546, %v543, 0.0
    %v1088 = vadd.f32 %v1086, %v1087
    %v1089 = vsel %vm546, %v544, 0.0
    %v1090 = vadd.f32 %v1088, %v1089
    %v1091 = vsel %vm546, %v545, 0.0
    %v1092 = vadd.f32 %v1090, %v1091
    %v1093 = vrot.slane %v1092, 4
    %v1094 = vadd.f32 %v1092, %v1093
    %v1095 = vrot.slane %v1094, 2
    %v1096 = vadd.f32 %v1094, %v1095
    %v1097 = vrot.slane %v1096, 1
    %v1098 = vadd.f32 %v1096, %v1097
    %v1099 = vpack.c.bf16 %v615, %v615
    %v1100 = vpack.c.bf16 %v684, %v684
    %v1101 = vpack.c.bf16 %v753, %v753
    %v1102 = vpack.c.bf16 %v822, %v822
    %v1103 = vpack.c.bf16 %v891, %v891
    %v1104 = vpack.c.bf16 %v960, %v960
    %v1105 = vpack.c.bf16 %v1029, %v1029
    %v1106 = vpack.c.bf16 %v1098, %v1098
    %v1107 = vld [vmem:[%s1] sm:$0xf]
    %v1108 = vld [vmem:[%s1 + $0x4] sm:$0xf]
    %v1109 = vld [vmem:[%s2] sm:$0x1]
    %v1111 = vlaneseq
    %v1112 = vshrl.u32 %v1111, 7
    %v1113 = vsub.s32 0, %v1112
    %v1114 = vrot.slane %v1109, %v1113
    %v1124 = vunpack.c.l.b16 %v1099
    %v1125 = vunpack.c.l.b16 %v1100
    %v1126 = vunpack.c.l.b16 %v1101
    %v1127 = vunpack.c.l.b16 %v1102
    %v1128 = vunpack.c.l.b16 %v1103
    %v1129 = vunpack.c.l.b16 %v1104
    %v1130 = vunpack.c.l.b16 %v1105
    %v1131 = vunpack.c.l.b16 %v1106
    %vm1132 = vcmask 1041409
    %v1133 = vsel %vm1132, %v1125, %v1124
    %vm1134 = vcmask 1042434
    %v1135 = vsel %vm1134, %v1126, %v1133
    %vm1136 = vcmask 1043459
    %v1137 = vsel %vm1136, %v1127, %v1135
    %vm1138 = vcmask 1044484
    %v1139 = vsel %vm1138, %v1128, %v1137
    %vm1140 = vcmask 1045509
    %v1141 = vsel %vm1140, %v1129, %v1139
    %vm1142 = vcmask 1046534
    %v1143 = vsel %vm1142, %v1130, %v1141
    %vm1144 = vcmask 1047559
    %v1145 = vsel %vm1144, %v1131, %v1143
    %v1146 = vpack.c.b16 %v1145, %v1145
    %v1149 = vunpack.c.l.b16 %v1107
    %v1150 = vunpack.c.l.b16 %v1108
    %v1151 = vpack.c.b16 %v1150, %v1149
    %v1154 = vsel %vm546, %v1146, 0
    %1156 = vmatprep.subr.bf16.mxu0 0
    %1157 = vmatpush1.bf16.msra.mxu0 %v1151
    %1158 = vmatprep.subr.bf16.mxu0 0
    %1159 = vmatpush1.bf16.msra.mxu0 0
    %1160 = vmatprep.subr.bf16.mxu0 0
    %1161 = vmatpush1.bf16.msra.mxu0 0
    %1162 = vmatprep.subr.bf16.mxu0 0
    %1163 = vmatpush1.bf16.msra.mxu0 0
    %1164 = vmatprep.subr.bf16.mxu0 0
    %1165 = vmatpush1.bf16.msra.mxu0 0
    %1166 = vmatprep.subr.bf16.mxu0 0
    %1167 = vmatpush1.bf16.msra.mxu0 0
    %1168 = vmatprep.subr.bf16.mxu0 0
    %1169 = vmatpush1.bf16.msra.mxu0 0
    %1170 = vmatprep.subr.bf16.mxu0 0
    %1171 = vmatpush1.bf16.msra.mxu0 0
    %1172 = vmatprep.subr.bf16.mxu0 0
    %1173 = vmatpush1.bf16.msra.mxu0 0
    %1174 = vmatprep.subr.bf16.mxu0 0
    %1175 = vmatpush1.bf16.msra.mxu0 0
    %1176 = vmatprep.subr.bf16.mxu0 0
    %1177 = vmatpush1.bf16.msra.mxu0 0
    %1178 = vmatprep.subr.bf16.mxu0 0
    %1179 = vmatpush1.bf16.msra.mxu0 0
    %1180 = vmatprep.subr.bf16.mxu0 0
    %1181 = vmatpush1.bf16.msra.mxu0 0
    %1182 = vmatprep.subr.bf16.mxu0 0
    %1183 = vmatpush1.bf16.msra.mxu0 0
    %1184 = vmatprep.subr.bf16.mxu0 0
    %1185 = vmatpush1.bf16.msra.mxu0 0
    %1186 = vmatprep.subr.bf16.mxu0 0
    %1187 = vmatpush1.bf16.msra.mxu0 0
    %1188 = vmatprep.mubr.bf16.mxu0 0
    %1189 = vmatmul.mubr.bf16.gmra.mrb[0].mxu0 %v1154
    %v1190 = vpop.f32.mrb[0].mxu0
    %v1191 = vadd.f32 %v1114, %v1190
    %v1192 = vpop.f32.mrb[0].mxu0
    %v1193 = vpop.f32.mrb[0].mxu0
    %v1194 = vpop.f32.mrb[0].mxu0
    %1195 = vdwg.mxu0
    %v1196 = vld [vmem:[%s3] sm:$0xf]
    %v1197 = vld [vmem:[%s3 + $0x4] sm:$0xf]
    %v1198 = vld [vmem:[%s3 + $0x8] sm:$0xf]
    %v1199 = vld [vmem:[%s3 + $0xc] sm:$0xf]
    %v1200 = vld [vmem:[%s3 + $0x10] sm:$0xf]
    %v1201 = vld [vmem:[%s3 + $0x14] sm:$0xf]
    %v1202 = vld [vmem:[%s3 + $0x18] sm:$0xf]
    %v1203 = vld [vmem:[%s3 + $0x1c] sm:$0xf]
    %v1204 = vld [vmem:[%s3 + $0x20] sm:$0xf]
    %v1205 = vld [vmem:[%s3 + $0x24] sm:$0xf]
    %v1206 = vld [vmem:[%s3 + $0x28] sm:$0xf]
    %v1207 = vld [vmem:[%s3 + $0x2c] sm:$0xf]
    %v1208 = vld [vmem:[%s3 + $0x30] sm:$0xf]
    %v1209 = vld [vmem:[%s3 + $0x34] sm:$0xf]
    %v1210 = vld [vmem:[%s3 + $0x38] sm:$0xf]
    %v1211 = vld [vmem:[%s3 + $0x3c] sm:$0xf]
    %v1212 = vld [vmem:[%s4] sm:$0x1]
    %v1213 = vld [vmem:[%s5] sm:$0xf]
    %v1214 = vld [vmem:[%s5 + $0x4] sm:$0xf]
    %v1215 = vld [vmem:[%s5 + $0x8] sm:$0xf]
    %v1216 = vld [vmem:[%s5 + $0xc] sm:$0xf]
    %v1217 = vld [vmem:[%s5 + $0x10] sm:$0xf]
    %v1218 = vld [vmem:[%s5 + $0x14] sm:$0xf]
    %v1219 = vld [vmem:[%s5 + $0x18] sm:$0xf]
    %v1220 = vld [vmem:[%s5 + $0x1c] sm:$0xf]
    %v1221 = vld [vmem:[%s5 + $0x20] sm:$0xf]
    %v1222 = vld [vmem:[%s5 + $0x24] sm:$0xf]
    %v1223 = vld [vmem:[%s5 + $0x28] sm:$0xf]
    %v1224 = vld [vmem:[%s5 + $0x2c] sm:$0xf]
    %v1225 = vld [vmem:[%s5 + $0x30] sm:$0xf]
    %v1226 = vld [vmem:[%s5 + $0x34] sm:$0xf]
    %v1227 = vld [vmem:[%s5 + $0x38] sm:$0xf]
    %v1228 = vld [vmem:[%s5 + $0x3c] sm:$0xf]
    %v1229 = vld [vmem:[%s6] sm:$0x1]
    %v1230 = vld [vmem:[%s7] sm:$0x1]
    %v1231 = vld [vmem:[%s8] sm:$0x1]
    %v1232 = vpack.c.bf16 %v1191, %v1191
    %v1234 = vlaneseq
    %v1235 = vshrl.u32 %v1234, 7
    %v1236 = vsub.s32 0, %v1235
    %v1237 = vrot.slane %v1212, %v1236
    %v1255 = vunpack.c.l.b16 %v1196
    %v1256 = vunpack.c.l.b16 %v1197
    %v1257 = vunpack.c.l.b16 %v1198
    %v1258 = vunpack.c.l.b16 %v1199
    %v1259 = vunpack.c.l.b16 %v1200
    %v1260 = vunpack.c.l.b16 %v1201
    %v1261 = vunpack.c.l.b16 %v1202
    %v1262 = vunpack.c.l.b16 %v1203
    %v1263 = vunpack.c.l.b16 %v1204
    %v1264 = vunpack.c.l.b16 %v1205
    %v1265 = vunpack.c.l.b16 %v1206
    %v1266 = vunpack.c.l.b16 %v1207
    %v1267 = vunpack.c.l.b16 %v1208
    %v1268 = vunpack.c.l.b16 %v1209
    %v1269 = vunpack.c.l.b16 %v1210
    %v1270 = vunpack.c.l.b16 %v1211
    %v1271 = vpack.c.b16 %v1256, %v1255
    %v1272 = vpack.c.b16 %v1258, %v1257
    %v1273 = vpack.c.b16 %v1260, %v1259
    %v1274 = vpack.c.b16 %v1262, %v1261
    %v1275 = vpack.c.b16 %v1264, %v1263
    %v1276 = vpack.c.b16 %v1266, %v1265
    %v1277 = vpack.c.b16 %v1268, %v1267
    %v1278 = vpack.c.b16 %v1270, %v1269
    %1287 = vmatprep.subr.bf16.mxu0 0
    %1288 = vmatpush1.bf16.msra.mxu0 %v1271
    %1289 = vmatprep.subr.bf16.mxu0 0
    %1290 = vmatpush1.bf16.msra.mxu0 %v1272
    %1291 = vmatprep.subr.bf16.mxu0 0
    %1292 = vmatpush1.bf16.msra.mxu0 %v1273
    %1293 = vmatprep.subr.bf16.mxu0 0
    %1294 = vmatpush1.bf16.msra.mxu0 %v1274
    %1295 = vmatprep.subr.bf16.mxu0 0
    %1296 = vmatpush1.bf16.msra.mxu0 %v1275
    %1297 = vmatprep.subr.bf16.mxu0 0
    %1298 = vmatpush1.bf16.msra.mxu0 %v1276
    %1299 = vmatprep.subr.bf16.mxu0 0
    %1300 = vmatpush1.bf16.msra.mxu0 %v1277
    %1301 = vmatprep.subr.bf16.mxu0 0
    %1302 = vmatpush1.bf16.msra.mxu0 %v1278
    %1303 = vmatprep.subr.bf16.mxu0 0
    %1304 = vmatpush1.bf16.msra.mxu0 0
    %1305 = vmatprep.subr.bf16.mxu0 0
    %1306 = vmatpush1.bf16.msra.mxu0 0
    %1307 = vmatprep.subr.bf16.mxu0 0
    %1308 = vmatpush1.bf16.msra.mxu0 0
    %1309 = vmatprep.subr.bf16.mxu0 0
    %1310 = vmatpush1.bf16.msra.mxu0 0
    %1311 = vmatprep.subr.bf16.mxu0 0
    %1312 = vmatpush1.bf16.msra.mxu0 0
    %1313 = vmatprep.subr.bf16.mxu0 0
    %1314 = vmatpush1.bf16.msra.mxu0 0
    %1315 = vmatprep.subr.bf16.mxu0 0
    %1316 = vmatpush1.bf16.msra.mxu0 0
    %1317 = vmatprep.subr.bf16.mxu0 0
    %1318 = vmatpush1.bf16.msra.mxu0 0
    %1319 = vmatprep.mubr.bf16.mxu0 0
    %1320 = vmatmul.mubr.bf16.gmra.mrb[0].mxu0 %v1232
    %v1321 = vpop.f32.mrb[0].mxu0
    %v1322 = vadd.f32 %v1237, %v1321
    %v1323 = vpop.f32.mrb[0].mxu0
    %v1324 = vpop.f32.mrb[0].mxu0
    %v1325 = vpop.f32.mrb[0].mxu0
    %1326 = vdwg.mxu0
    %v1327 = vmul.f32 %v1322, 0.5
    %v1328 = vmul.f32 %v1322, 0.70710677
    %v1329 = verf.f32.pop %v1328
    %v1330 = vadd.f32 %v1329, 1.0
    %v1331 = vmul.f32 %v1327, %v1330
    %v1332 = vpack.c.bf16 %v1331, %v1331
    %v1334 = vlaneseq
    %v1335 = vshrl.u32 %v1334, 7
    %v1336 = vsub.s32 0, %v1335
    %v1337 = vrot.slane %v1229, %v1336
    %v1355 = vunpack.c.l.b16 %v1213
    %v1356 = vunpack.c.l.b16 %v1214
    %v1357 = vunpack.c.l.b16 %v1215
    %v1358 = vunpack.c.l.b16 %v1216
    %v1359 = vunpack.c.l.b16 %v1217
    %v1360 = vunpack.c.l.b16 %v1218
    %v1361 = vunpack.c.l.b16 %v1219
    %v1362 = vunpack.c.l.b16 %v1220
    %v1363 = vunpack.c.l.b16 %v1221
    %v1364 = vunpack.c.l.b16 %v1222
    %v1365 = vunpack.c.l.b16 %v1223
    %v1366 = vunpack.c.l.b16 %v1224
    %v1367 = vunpack.c.l.b16 %v1225
    %v1368 = vunpack.c.l.b16 %v1226
    %v1369 = vunpack.c.l.b16 %v1227
    %v1370 = vunpack.c.l.b16 %v1228
    %v1371 = vpack.c.b16 %v1356, %v1355
    %v1372 = vpack.c.b16 %v1358, %v1357
    %v1373 = vpack.c.b16 %v1360, %v1359
    %v1374 = vpack.c.b16 %v1362, %v1361
    %v1375 = vpack.c.b16 %v1364, %v1363
    %v1376 = vpack.c.b16 %v1366, %v1365
    %v1377 = vpack.c.b16 %v1368, %v1367
    %v1378 = vpack.c.b16 %v1370, %v1369
    %1387 = vmatprep.subr.bf16.mxu0 0
    %1388 = vmatpush1.bf16.msra.mxu0 %v1371
    %1389 = vmatprep.subr.bf16.mxu0 0
    %1390 = vmatpush1.bf16.msra.mxu0 %v1372
    %1391 = vmatprep.subr.bf16.mxu0 0
    %1392 = vmatpush1.bf16.msra.mxu0 %v1373
    %1393 = vmatprep.subr.bf16.mxu0 0
    %1394 = vmatpush1.bf16.msra.mxu0 %v1374
    %1395 = vmatprep.subr.bf16.mxu0 0
    %1396 = vmatpush1.bf16.msra.mxu0 %v1375
    %1397 = vmatprep.subr.bf16.mxu0 0
    %1398 = vmatpush1.bf16.msra.mxu0 %v1376
    %1399 = vmatprep.subr.bf16.mxu0 0
    %1400 = vmatpush1.bf16.msra.mxu0 %v1377
    %1401 = vmatprep.subr.bf16.mxu0 0
    %1402 = vmatpush1.bf16.msra.mxu0 %v1378
    %1403 = vmatprep.subr.bf16.mxu0 0
    %1404 = vmatpush1.bf16.msra.mxu0 0
    %1405 = vmatprep.subr.bf16.mxu0 0
    %1406 = vmatpush1.bf16.msra.mxu0 0
    %1407 = vmatprep.subr.bf16.mxu0 0
    %1408 = vmatpush1.bf16.msra.mxu0 0
    %1409 = vmatprep.subr.bf16.mxu0 0
    %1410 = vmatpush1.bf16.msra.mxu0 0
    %1411 = vmatprep.subr.bf16.mxu0 0
    %1412 = vmatpush1.bf16.msra.mxu0 0
    %1413 = vmatprep.subr.bf16.mxu0 0
    %1414 = vmatpush1.bf16.msra.mxu0 0
    %1415 = vmatprep.subr.bf16.mxu0 0
    %1416 = vmatpush1.bf16.msra.mxu0 0
    %1417 = vmatprep.subr.bf16.mxu0 0
    %1418 = vmatpush1.bf16.msra.mxu0 0
    %1419 = vmatprep.mubr.bf16.mxu0 0
    %1420 = vmatmul.mubr.bf16.gmra.mrb[0].mxu0 %v1332
    %v1421 = vpop.f32.mrb[0].mxu0
    %v1422 = vadd.f32 %v1337, %v1421
    %v1423 = vpop.f32.mrb[0].mxu0
    %v1424 = vpop.f32.mrb[0].mxu0
    %v1425 = vpop.f32.mrb[0].mxu0
    %1426 = vdwg.mxu0
    %v1427 = vadd.f32 %v1422, %v1322
    %1428 = vadd.xlane.f32.xlu0 %v1427
    %v1429 = vpop.xlane.xlu0 %1428
    %v1430 = vrcp.pop 128.0
    %v1431 = vmul.f32 %v1429, %v1430
    %v1432 = vsub.f32 %v1427, %v1431
    %v1433 = vmul.f32 %v1432, %v1432
    %1434 = vadd.xlane.f32.xlu0 %v1433
    %v1435 = vpop.xlane.xlu0 %1434
    %v1436 = vmul.f32 %v1435, %v1430
    %v1437 = vadd.f32 %v1436, 1e-05
    %v1438 = vrsqrt.pop %v1437
    %v1439 = vmul.f32 %v1432, %v1438
    %v1441 = vlaneseq
    %v1442 = vshrl.u32 %v1441, 7
    %v1443 = vsub.s32 0, %v1442
    %v1444 = vrot.slane %v1230, %v1443
    %v1446 = vmul.f32 %v1439, %v1444
    %v1448 = vlaneseq
    %v1449 = vshrl.u32 %v1448, 7
    %v1450 = vsub.s32 0, %v1449
    %v1451 = vrot.slane %v1231, %v1450
    %v1453 = vadd.f32 %v1446, %v1451
    %1454 = vst [vmem:[#allocation2] sm:$0xff] %v1453
    // Predicated region
    $region38: #{tpu_custom_call.1} parent=1 // pred_check
      _
    $region39: #{tpu_custom_call.1} parent=1 // pred_check_branch
      %1456 = sbr.rel (0) target = $region41
    $region40: #{tpu_custom_call.1} parent=1 // pred_region
      %s1458 = ssub.s32 128, 128
      %1459 = vsyncadd [#allocation3], %s1458
      %s1461 = sshll.u32 [#allocation2], 4
      %s1462 = int_to_ptr.vmem [resolvable:$true] %s1461
      %1464 = dma.vmem_to_hbm [thread:$0]  %s1462, 128, %s9, [#allocation3]
    $region41: #{tpu_custom_call.1} parent=1 // pred_fallthru
      _
    // Predicated region
    $region42: #{tpu_custom_call.1} parent=1 // pred_check
      _
    $region43: #{tpu_custom_call.1} parent=1 // pred_check_branch
      %1466 = sbr.rel (0) target = $region45
    $region44: #{tpu_custom_call.1} parent=1 // pred_region
      %1467 = dma.done [#allocation3], 128
    $region45: #{tpu_custom_call.1} parent=1 // pred_fallthru
      _
    %1468 = vsyncpa [#allocation3], 1

</llo_original>
